<compile_context>
chip_gen: v5e
topology: v5e:2x2
jax: 0.10.0
libtpu: 0.0.40
codegen_flags: <defaults>
</compile_context>

<pallas_src>
import jax
import jax.numpy as jnp
from jax import lax
from jax.experimental import pallas as pl
from jax.experimental.pallas import tpu as pltpu

USER_NUM = 4
NOISE_RATIO = 0.1          # unused by forward(); kept for parity with the module
EPS = 1e-5                 # nn.BatchNorm1d default eps
IN_FEAT = USER_NUM * USER_NUM
H1, H2, OUT = 64, 32, 4


def _round_up(n, m):
    return ((n + m - 1) // m) * m


def _make_kernel(batch, tile_b):
    """Builds the fused 3-pass MLP+BN kernel for a static batch size."""
    inv_b = 1.0 / float(batch)
    needs_mask = (_round_up(batch, tile_b) != batch)   # padded lanes present?

    def kernel(x_ref,
               w1_ref, b1_ref, g1_ref, be1_ref,
               w2_ref, b2_ref, g2_ref, be2_ref,
               w3_ref, b3_ref,
               o_ref,
               sum1, sumsq1, s1, t1,
               sum2, sumsq2, s2, t2):
        phase = pl.program_id(0)          # 0: bn1 stats, 1: bn2 stats, 2: output
        tile = pl.program_id(1)           # batch tile
        n_tiles = pl.num_programs(1)

        if needs_mask:
            col = tile * tile_b + lax.broadcasted_iota(jnp.int32, (1, tile_b), 1)
            lane_ok = col < batch

            def masked(h):
                return jnp.where(lane_ok, h, 0.0)
        else:
            def masked(h):
                return h

        # --- shared recompute: h1 = relu(W1 @ X + b1), batch on lanes --------
        x = x_ref[...]                                               # (16, tb)
        h1 = jnp.dot(w1_ref[...], x, preferred_element_type=jnp.float32)
        h1 = jnp.maximum(h1 + b1_ref[...], 0.0)                      # (64, tb)

        # --- pass 0: accumulate bn1 batch statistics --------------------------
        @pl.when(phase == 0)
        def _():
            @pl.when(tile == 0)
            def _():
                sum1[...] = jnp.zeros_like(sum1)
                sumsq1[...] = jnp.zeros_like(sumsq1)
                sum2[...] = jnp.zeros_like(sum2)
                sumsq2[...] = jnp.zeros_like(sumsq2)

            h1m = masked(h1)
            sum1[...] += jnp.sum(h1m, axis=1, keepdims=True)
            sumsq1[...] += jnp.sum(h1m * h1m, axis=1, keepdims=True)

            @pl.when(tile == n_tiles - 1)
            def _():
                mean = sum1[...] * inv_b
                var = sumsq1[...] * inv_b - mean * mean      # one-pass variance
                r = lax.rsqrt(var + EPS) * g1_ref[...]
                s1[...] = r
                t1[...] = be1_ref[...] - mean * r

        # --- passes 1 & 2: apply folded bn1, fc2 + relu ------------------------
        @pl.when(phase >= 1)
        def _():
            h1n = h1 * s1[...] + t1[...]
            h2 = jnp.dot(w2_ref[...], h1n, preferred_element_type=jnp.float32)
            h2 = jnp.maximum(h2 + b2_ref[...], 0.0)                  # (32, tb)

            @pl.when(phase == 1)
            def _():
                h2m = masked(h2)
                sum2[...] += jnp.sum(h2m, axis=1, keepdims=True)
                sumsq2[...] += jnp.sum(h2m * h2m, axis=1, keepdims=True)

                @pl.when(tile == n_tiles - 1)
                def _():
                    mean = sum2[...] * inv_b
                    var = sumsq2[...] * inv_b - mean * mean
                    r = lax.rsqrt(var + EPS) * g2_ref[...]
                    s2[...] = r
                    t2[...] = be2_ref[...] - mean * r

            @pl.when(phase == 2)
            def _():
                h2n = h2 * s2[...] + t2[...]
                logits = jnp.dot(w3_ref[...], h2n,
                                 preferred_element_type=jnp.float32) + b3_ref[...]
                o_ref[...] = jax.nn.sigmoid(logits)                  # (4, tb)

        # keep intermediate HBM write-backs deterministic (overwritten in pass 2)
        @pl.when(phase != 2)
        def _():
            o_ref[...] = jnp.zeros_like(o_ref)

    return kernel


def pcnet_forward(x, params, *, tile_b=1024):
    """x: (B, user_num, user_num) or (B, user_num*user_num), float32 -> (B, 4)."""
    x2d = x.reshape(-1, IN_FEAT).astype(jnp.float32)
    batch = x2d.shape[0]

    tb = min(int(tile_b), _round_up(batch, 128))      # lane-aligned batch tile
    b_pad = _round_up(batch, tb)
    n_tiles = b_pad // tb

    # batch-on-lanes layout: (features, batch_padded)
    xt = jnp.pad(x2d, ((0, b_pad - batch), (0, 0))).T               # (16, b_pad)

    kernel = _make_kernel(batch, tb)

    in_specs = [
        pl.BlockSpec((IN_FEAT, tb), lambda p, t: (0, t)),           # x tile
        pl.BlockSpec((H1, IN_FEAT), lambda p, t: (0, 0)),           # w1 (resident)
        pl.BlockSpec((H1, 1), lambda p, t: (0, 0)),                 # b1
        pl.BlockSpec((H1, 1), lambda p, t: (0, 0)),                 # g1
        pl.BlockSpec((H1, 1), lambda p, t: (0, 0)),                 # be1
        pl.BlockSpec((H2, H1), lambda p, t: (0, 0)),                # w2
        pl.BlockSpec((H2, 1), lambda p, t: (0, 0)),                 # b2
        pl.BlockSpec((H2, 1), lambda p, t: (0, 0)),                 # g2
        pl.BlockSpec((H2, 1), lambda p, t: (0, 0)),                 # be2
        pl.BlockSpec((OUT, H2), lambda p, t: (0, 0)),               # w3
        pl.BlockSpec((OUT, 1), lambda p, t: (0, 0)),                # b3
    ]

    out_t = pl.pallas_call(
        kernel,
        out_shape=jax.ShapeDtypeStruct((OUT, b_pad), jnp.float32),
        grid_spec=pltpu.PrefetchScalarGridSpec(
            num_scalar_prefetch=0,
            grid=(3, n_tiles),                       # (BN pass, batch tile)
            in_specs=in_specs,
            out_specs=pl.BlockSpec((OUT, tb), lambda p, t: (0, t)),
            scratch_shapes=[
                pltpu.VMEM((H1, 1), jnp.float32),    # sum1
                pltpu.VMEM((H1, 1), jnp.float32),    # sumsq1
                pltpu.VMEM((H1, 1), jnp.float32),    # s1 (folded scale)
                pltpu.VMEM((H1, 1), jnp.float32),    # t1 (folded shift)
                pltpu.VMEM((H2, 1), jnp.float32),    # sum2
                pltpu.VMEM((H2, 1), jnp.float32),    # sumsq2
                pltpu.VMEM((H2, 1), jnp.float32),    # s2
                pltpu.VMEM((H2, 1), jnp.float32),    # t2
            ],
        ),
        compiler_params=pltpu.CompilerParams(
            # Both axes are sequential: batch tiles accumulate *global* BN
            # statistics and the 3 passes are ordered. Megacore sharding would
            # need eval-mode (folded) BN.
            dimension_semantics=("arbitrary", "arbitrary"),
        ),
    )(xt,
      params["w1"], params["b1"], params["g1"], params["be1"],
      params["w2"], params["b2"], params["g2"], params["be2"],
      params["w3"], params["b3"])

    return out_t[:, :batch].T                                       # (B, 4)


def init_params(key):
    """Synthetic params matching nn.Linear / BatchNorm1d shapes.

    Linear weights kept in PyTorch (out_features, in_features) layout since the
    kernel computes W @ X. Per-feature vectors stored as (F, 1) so they
    broadcast over the lane (batch) axis.
    """
    k = jax.random.split(key, 6)

    def lin(kw, kb, fan_in, fan_out):
        bound = 1.0 / float(fan_in) ** 0.5
        w = jax.random.uniform(kw, (fan_out, fan_in), jnp.float32, -bound, bound)
        b = jax.random.uniform(kb, (fan_out, 1), jnp.float32, -bound, bound)
        return w, b

    w1, b1 = lin(k[0], k[1], IN_FEAT, H1)
    w2, b2 = lin(k[2], k[3], H1, H2)
    w3, b3 = lin(k[4], k[5], H2, OUT)
    return {
        "w1": w1, "b1": b1,
        "g1": jnp.ones((H1, 1), jnp.float32), "be1": jnp.zeros((H1, 1), jnp.float32),
        "w2": w2, "b2": b2,
        "g2": jnp.ones((H2, 1), jnp.float32), "be2": jnp.zeros((H2, 1), jnp.float32),
        "w3": w3, "b3": b3,
    }


def reference_forward(x, params):
    """Pure-JAX reference mirroring the PyTorch module (training-mode BN)."""
    x2d = x.reshape(-1, IN_FEAT).astype(jnp.float32)

    def bn(h, g, be):
        m = jnp.mean(h, axis=0)
        v = jnp.mean((h - m) ** 2, axis=0)
        return (h - m) * lax.rsqrt(v + EPS) * g + be

    h1 = jnp.maximum(x2d @ params["w1"].T + params["b1"][:, 0], 0.0)
    h1 = bn(h1, params["g1"][:, 0], params["be1"][:, 0])
    h2 = jnp.maximum(h1 @ params["w2"].T + params["b2"][:, 0], 0.0)
    h2 = bn(h2, params["g2"][:, 0], params["be2"][:, 0])
    return jax.nn.sigmoid(h2 @ params["w3"].T + params["b3"][:, 0])


if __name__ == "__main__":
    key = jax.random.PRNGKey(0)
    pkey, xkey = jax.random.split(key)

    params = init_params(pkey)
    # Batch of 8 CSI matrices, shape (B, user_num, user_num) — forward flattens them.
    x = jax.random.normal(xkey, (8, USER_NUM, USER_NUM), jnp.float32)

    out = jax.block_until_ready(pcnet_forward(x, params))
    ref = jax.block_until_ready(reference_forward(x, params))

    assert out.shape == (8, OUT)
    assert bool(jnp.all(jnp.isfinite(out)))
    assert bool(jnp.all((out >= 0.0) & (out <= 1.0)))
    err = float(jnp.max(jnp.abs(out - ref)))
    assert err < 2e-3, f"mismatch vs reference: {err}"
    print("KERNEL_OK")
</pallas_src>

<mosaic_0001>
module attributes {stable_mosaic.version = 11 : i64} {
  func.func @kernel(%arg0: i32, %arg1: i32, %arg2: memref<16x128xf32, #tpu.memory_space<vmem>>, %arg3: memref<64x16xf32, #tpu.memory_space<vmem>>, %arg4: memref<64x1xf32, #tpu.memory_space<vmem>>, %arg5: memref<64x1xf32, #tpu.memory_space<vmem>>, %arg6: memref<64x1xf32, #tpu.memory_space<vmem>>, %arg7: memref<32x64xf32, #tpu.memory_space<vmem>>, %arg8: memref<32x1xf32, #tpu.memory_space<vmem>>, %arg9: memref<32x1xf32, #tpu.memory_space<vmem>>, %arg10: memref<32x1xf32, #tpu.memory_space<vmem>>, %arg11: memref<4x32xf32, #tpu.memory_space<vmem>>, %arg12: memref<4x1xf32, #tpu.memory_space<vmem>>, %arg13: memref<4x128xf32, #tpu.memory_space<vmem>>, %arg14: memref<64x1xf32, #tpu.memory_space<vmem>>, %arg15: memref<64x1xf32, #tpu.memory_space<vmem>>, %arg16: memref<64x1xf32, #tpu.memory_space<vmem>>, %arg17: memref<64x1xf32, #tpu.memory_space<vmem>>, %arg18: memref<32x1xf32, #tpu.memory_space<vmem>>, %arg19: memref<32x1xf32, #tpu.memory_space<vmem>>, %arg20: memref<32x1xf32, #tpu.memory_space<vmem>>, %arg21: memref<32x1xf32, #tpu.memory_space<vmem>>) attributes {dimension_semantics = [#tpu.dimension_semantics<arbitrary>, #tpu.dimension_semantics<arbitrary>], iteration_bounds = array<i64: 3, 1>, scalar_prefetch = 0 : i64, scratch_operands = 8 : i64, tpu.core_type = #tpu.core_type<tc>, window_params = [{transform_indices = @transform_0, window_bounds = array<i64: 16, 128>}, {pipeline_mode = #tpu.pipeline_mode<synchronous>, transform_indices = @transform_1, window_bounds = array<i64: 64, 16>}, {pipeline_mode = #tpu.pipeline_mode<synchronous>, transform_indices = @transform_2, window_bounds = array<i64: 64, 1>}, {pipeline_mode = #tpu.pipeline_mode<synchronous>, transform_indices = @transform_3, window_bounds = array<i64: 64, 1>}, {pipeline_mode = #tpu.pipeline_mode<synchronous>, transform_indices = @transform_4, window_bounds = array<i64: 64, 1>}, {pipeline_mode = #tpu.pipeline_mode<synchronous>, transform_indices = @transform_5, window_bounds = array<i64: 32, 64>}, {pipeline_mode = #tpu.pipeline_mode<synchronous>, transform_indices = @transform_6, window_bounds = array<i64: 32, 1>}, {pipeline_mode = #tpu.pipeline_mode<synchronous>, transform_indices = @transform_7, window_bounds = array<i64: 32, 1>}, {pipeline_mode = #tpu.pipeline_mode<synchronous>, transform_indices = @transform_8, window_bounds = array<i64: 32, 1>}, {pipeline_mode = #tpu.pipeline_mode<synchronous>, transform_indices = @transform_9, window_bounds = array<i64: 4, 32>}, {pipeline_mode = #tpu.pipeline_mode<synchronous>, transform_indices = @transform_10, window_bounds = array<i64: 4, 1>}, {transform_indices = @transform_11, window_bounds = array<i64: 4, 128>}]} {
    %c128_i32 = arith.constant 128 : i32
    %0 = arith.muli %arg1, %c128_i32 : i32
    %1 = tpu.iota {dimensions = array<i32: 1>} : vector<1x128xi32>
    %2 = vector.broadcast %0 : i32 to vector<1x128xi32>
    %3 = arith.addi %2, %1 : vector<1x128xi32>
    %c8_i32 = arith.constant 8 : i32
    %4 = vector.broadcast %c8_i32 : i32 to vector<1x128xi32>
    %5 = arith.cmpi slt, %3, %4 : vector<1x128xi32>
    %c0 = arith.constant 0 : index
    %c0_0 = arith.constant 0 : index
    %6 = vector.load %arg2[%c0, %c0_0] : memref<16x128xf32, #tpu.memory_space<vmem>>, vector<16x128xf32>
    %c0_1 = arith.constant 0 : index
    %c0_2 = arith.constant 0 : index
    %7 = vector.load %arg3[%c0_1, %c0_2] : memref<64x16xf32, #tpu.memory_space<vmem>>, vector<64x16xf32>
    %cst = arith.constant dense<0.000000e+00> : vector<64x128xf32>
    %8 = tpu.matmul %7, %6, %cst {dimension_numbers = #tpu.dot_dimension_numbers<[1], [0], [0], [1], [0, 0, 1, 1], [], []>} : vector<64x16xf32>, vector<16x128xf32>, vector<64x128xf32> -> vector<64x128xf32>
    %c0_3 = arith.constant 0 : index
    %c0_4 = arith.constant 0 : index
    %9 = vector.load %arg4[%c0_3, %c0_4] : memref<64x1xf32, #tpu.memory_space<vmem>>, vector<64x1xf32>
    %10 = vector.broadcast %9 : vector<64x1xf32> to vector<64x128xf32>
    %11 = arith.addf %8, %10 : vector<64x128xf32>
    %cst_5 = arith.constant 0.000000e+00 : f32
    %12 = vector.broadcast %cst_5 : f32 to vector<64x128xf32>
    %13 = arith.maximumf %11, %12 : vector<64x128xf32>
    %c0_i32 = arith.constant 0 : i32
    %14 = arith.cmpi eq, %arg0, %c0_i32 : i32
    %15 = arith.extui %14 : i1 to i32
    %c0_i32_6 = arith.constant 0 : i32
    %16 = arith.cmpi ne, %15, %c0_i32_6 : i32
    scf.if %16 {
      %c0_i32_9 = arith.constant 0 : i32
      %23 = arith.cmpi eq, %arg1, %c0_i32_9 : i32
      %24 = arith.extui %23 : i1 to i32
      %c0_i32_10 = arith.constant 0 : i32
      %25 = arith.cmpi ne, %24, %c0_i32_10 : i32
      scf.if %25 {
        %cst_24 = arith.constant 0.000000e+00 : f32
        %44 = vector.broadcast %cst_24 : f32 to vector<64x1xf32>
        %c0_25 = arith.constant 0 : index
        %c0_26 = arith.constant 0 : index
        %45 = vector.load %arg14[%c0_25, %c0_26] : memref<64x1xf32, #tpu.memory_space<vmem>>, vector<64x1xf32>
        tpu.vector_store %arg14[%c0_25, %c0_26], %44 {strides = array<i32>} : memref<64x1xf32, #tpu.memory_space<vmem>>, vector<64x1xf32>,
        %cst_27 = arith.constant 0.000000e+00 : f32
        %46 = vector.broadcast %cst_27 : f32 to vector<64x1xf32>
        %c0_28 = arith.constant 0 : index
        %c0_29 = arith.constant 0 : index
        %47 = vector.load %arg15[%c0_28, %c0_29] : memref<64x1xf32, #tpu.memory_space<vmem>>, vector<64x1xf32>
        tpu.vector_store %arg15[%c0_28, %c0_29], %46 {strides = array<i32>} : memref<64x1xf32, #tpu.memory_space<vmem>>, vector<64x1xf32>,
        %cst_30 = arith.constant 0.000000e+00 : f32
        %48 = vector.broadcast %cst_30 : f32 to vector<32x1xf32>
        %c0_31 = arith.constant 0 : index
        %c0_32 = arith.constant 0 : index
        %49 = vector.load %arg18[%c0_31, %c0_32] : memref<32x1xf32, #tpu.memory_space<vmem>>, vector<32x1xf32>
        tpu.vector_store %arg18[%c0_31, %c0_32], %48 {strides = array<i32>} : memref<32x1xf32, #tpu.memory_space<vmem>>, vector<32x1xf32>,
        %cst_33 = arith.constant 0.000000e+00 : f32
        %50 = vector.broadcast %cst_33 : f32 to vector<32x1xf32>
        %c0_34 = arith.constant 0 : index
        %c0_35 = arith.constant 0 : index
        %51 = vector.load %arg19[%c0_34, %c0_35] : memref<32x1xf32, #tpu.memory_space<vmem>>, vector<32x1xf32>
        tpu.vector_store %arg19[%c0_34, %c0_35], %50 {strides = array<i32>} : memref<32x1xf32, #tpu.memory_space<vmem>>, vector<32x1xf32>,
      } else {
      }
      %cst_11 = arith.constant 0.000000e+00 : f32
      %26 = vector.shape_cast %5 : vector<1x128xi1> to vector<1x128xi1>
      %27 = vector.broadcast %26 : vector<1x128xi1> to vector<64x128xi1>
      %28 = vector.broadcast %cst_11 : f32 to vector<64x128xf32>
      %29 = arith.select %27, %13, %28 : vector<64x128xi1>, vector<64x128xf32>
      %c0_12 = arith.constant 0 : index
      %c0_13 = arith.constant 0 : index
      %30 = vector.load %arg14[%c0_12, %c0_13] : memref<64x1xf32, #tpu.memory_space<vmem>>, vector<64x1xf32>
      %cst_14 = arith.constant dense<0.000000e+00> : vector<64xf32>
      %31 = vector.multi_reduction <add>, %29, %cst_14 [1] : vector<64x128xf32> to vector<64xf32>
      %32 = vector.shape_cast %31 : vector<64xf32> to vector<64x1xf32>
      %33 = arith.addf %30, %32 : vector<64x1xf32>
      %c0_15 = arith.constant 0 : index
      %c0_16 = arith.constant 0 : index
      %34 = vector.load %arg14[%c0_15, %c0_16] : memref<64x1xf32, #tpu.memory_space<vmem>>, vector<64x1xf32>
      tpu.vector_store %arg14[%c0_15, %c0_16], %33 {strides = array<i32>} : memref<64x1xf32, #tpu.memory_space<vmem>>, vector<64x1xf32>,
      %c0_17 = arith.constant 0 : index
      %c0_18 = arith.constant 0 : index
      %35 = vector.load %arg15[%c0_17, %c0_18] : memref<64x1xf32, #tpu.memory_space<vmem>>, vector<64x1xf32>
      %36 = arith.mulf %29, %29 : vector<64x128xf32>
      %cst_19 = arith.constant dense<0.000000e+00> : vector<64xf32>
      %37 = vector.multi_reduction <add>, %36, %cst_19 [1] : vector<64x128xf32> to vector<64xf32>
      %38 = vector.shape_cast %37 : vector<64xf32> to vector<64x1xf32>
      %39 = arith.addf %35, %38 : vector<64x1xf32>
      %c0_20 = arith.constant 0 : index
      %c0_21 = arith.constant 0 : index
      %40 = vector.load %arg15[%c0_20, %c0_21] : memref<64x1xf32, #tpu.memory_space<vmem>>, vector<64x1xf32>
      tpu.vector_store %arg15[%c0_20, %c0_21], %39 {strides = array<i32>} : memref<64x1xf32, #tpu.memory_space<vmem>>, vector<64x1xf32>,
      %c0_i32_22 = arith.constant 0 : i32
      %41 = arith.cmpi eq, %arg1, %c0_i32_22 : i32
      %42 = arith.extui %41 : i1 to i32
      %c0_i32_23 = arith.constant 0 : i32
      %43 = arith.cmpi ne, %42, %c0_i32_23 : i32
      scf.if %43 {
        %c0_24 = arith.constant 0 : index
        %c0_25 = arith.constant 0 : index
        %44 = vector.load %arg14[%c0_24, %c0_25] : memref<64x1xf32, #tpu.memory_space<vmem>>, vector<64x1xf32>
        %cst_26 = arith.constant 1.250000e-01 : f32
        %45 = vector.broadcast %cst_26 : f32 to vector<64x1xf32>
        %46 = arith.mulf %44, %45 : vector<64x1xf32>
        %c0_27 = arith.constant 0 : index
        %c0_28 = arith.constant 0 : index
        %47 = vector.load %arg15[%c0_27, %c0_28] : memref<64x1xf32, #tpu.memory_space<vmem>>, vector<64x1xf32>
        %cst_29 = arith.constant 1.250000e-01 : f32
        %48 = vector.broadcast %cst_29 : f32 to vector<64x1xf32>
        %49 = arith.mulf %47, %48 : vector<64x1xf32>
        %50 = arith.mulf %46, %46 : vector<64x1xf32>
        %51 = arith.subf %49, %50 : vector<64x1xf32>
        %cst_30 = arith.constant 9.99999974E-6 : f32
        %52 = vector.broadcast %cst_30 : f32 to vector<64x1xf32>
        %53 = arith.addf %51, %52 : vector<64x1xf32>
        %54 = math.rsqrt %53 : vector<64x1xf32>
        %c0_31 = arith.constant 0 : index
        %c0_32 = arith.constant 0 : index
        %55 = vector.load %arg5[%c0_31, %c0_32] : memref<64x1xf32, #tpu.memory_space<vmem>>, vector<64x1xf32>
        %56 = arith.mulf %54, %55 : vector<64x1xf32>
        %c0_33 = arith.constant 0 : index
        %c0_34 = arith.constant 0 : index
        %57 = vector.load %arg16[%c0_33, %c0_34] : memref<64x1xf32, #tpu.memory_space<vmem>>, vector<64x1xf32>
        tpu.vector_store %arg16[%c0_33, %c0_34], %56 {strides = array<i32>} : memref<64x1xf32, #tpu.memory_space<vmem>>, vector<64x1xf32>,
        %c0_35 = arith.constant 0 : index
        %c0_36 = arith.constant 0 : index
        %58 = vector.load %arg6[%c0_35, %c0_36] : memref<64x1xf32, #tpu.memory_space<vmem>>, vector<64x1xf32>
        %59 = arith.mulf %46, %56 : vector<64x1xf32>
        %60 = arith.subf %58, %59 : vector<64x1xf32>
        %c0_37 = arith.constant 0 : index
        %c0_38 = arith.constant 0 : index
        %61 = vector.load %arg17[%c0_37, %c0_38] : memref<64x1xf32, #tpu.memory_space<vmem>>, vector<64x1xf32>
        tpu.vector_store %arg17[%c0_37, %c0_38], %60 {strides = array<i32>} : memref<64x1xf32, #tpu.memory_space<vmem>>, vector<64x1xf32>,
      } else {
      }
    } else {
    }
    %c1_i32 = arith.constant 1 : i32
    %17 = arith.cmpi sge, %arg0, %c1_i32 : i32
    %18 = arith.extui %17 : i1 to i32
    %c0_i32_7 = arith.constant 0 : i32
    %19 = arith.cmpi ne, %18, %c0_i32_7 : i32
    scf.if %19 {
      %c0_9 = arith.constant 0 : index
      %c0_10 = arith.constant 0 : index
      %23 = vector.load %arg16[%c0_9, %c0_10] : memref<64x1xf32, #tpu.memory_space<vmem>>, vector<64x1xf32>
      %24 = vector.broadcast %23 : vector<64x1xf32> to vector<64x128xf32>
      %25 = arith.mulf %13, %24 : vector<64x128xf32>
      %c0_11 = arith.constant 0 : index
      %c0_12 = arith.constant 0 : index
      %26 = vector.load %arg17[%c0_11, %c0_12] : memref<64x1xf32, #tpu.memory_space<vmem>>, vector<64x1xf32>
      %27 = vector.broadcast %26 : vector<64x1xf32> to vector<64x128xf32>
      %28 = arith.addf %25, %27 : vector<64x128xf32>
      %c0_13 = arith.constant 0 : index
      %c0_14 = arith.constant 0 : index
      %29 = vector.load %arg7[%c0_13, %c0_14] : memref<32x64xf32, #tpu.memory_space<vmem>>, vector<32x64xf32>
      %cst_15 = arith.constant dense<0.000000e+00> : vector<32x128xf32>
      %30 = tpu.matmul %29, %28, %cst_15 {dimension_numbers = #tpu.dot_dimension_numbers<[1], [0], [0], [1], [0, 0, 1, 1], [], []>} : vector<32x64xf32>, vector<64x128xf32>, vector<32x128xf32> -> vector<32x128xf32>
      %c0_16 = arith.constant 0 : index
      %c0_17 = arith.constant 0 : index
      %31 = vector.load %arg8[%c0_16, %c0_17] : memref<32x1xf32, #tpu.memory_space<vmem>>, vector<32x1xf32>
      %32 = vector.broadcast %31 : vector<32x1xf32> to vector<32x128xf32>
      %33 = arith.addf %30, %32 : vector<32x128xf32>
      %cst_18 = arith.constant 0.000000e+00 : f32
      %34 = vector.broadcast %cst_18 : f32 to vector<32x128xf32>
      %35 = arith.maximumf %33, %34 : vector<32x128xf32>
      %c1_i32_19 = arith.constant 1 : i32
      %36 = arith.cmpi eq, %arg0, %c1_i32_19 : i32
      %37 = arith.extui %36 : i1 to i32
      %c0_i32_20 = arith.constant 0 : i32
      %38 = arith.cmpi ne, %37, %c0_i32_20 : i32
      scf.if %38 {
        %cst_23 = arith.constant 0.000000e+00 : f32
        %42 = vector.shape_cast %5 : vector<1x128xi1> to vector<1x128xi1>
        %43 = vector.broadcast %42 : vector<1x128xi1> to vector<32x128xi1>
        %44 = vector.broadcast %cst_23 : f32 to vector<32x128xf32>
        %45 = arith.select %43, %35, %44 : vector<32x128xi1>, vector<32x128xf32>
        %c0_24 = arith.constant 0 : index
        %c0_25 = arith.constant 0 : index
        %46 = vector.load %arg18[%c0_24, %c0_25] : memref<32x1xf32, #tpu.memory_space<vmem>>, vector<32x1xf32>
        %cst_26 = arith.constant dense<0.000000e+00> : vector<32xf32>
        %47 = vector.multi_reduction <add>, %45, %cst_26 [1] : vector<32x128xf32> to vector<32xf32>
        %48 = vector.shape_cast %47 : vector<32xf32> to vector<32x1xf32>
        %49 = arith.addf %46, %48 : vector<32x1xf32>
        %c0_27 = arith.constant 0 : index
        %c0_28 = arith.constant 0 : index
        %50 = vector.load %arg18[%c0_27, %c0_28] : memref<32x1xf32, #tpu.memory_space<vmem>>, vector<32x1xf32>
        tpu.vector_store %arg18[%c0_27, %c0_28], %49 {strides = array<i32>} : memref<32x1xf32, #tpu.memory_space<vmem>>, vector<32x1xf32>,
        %c0_29 = arith.constant 0 : index
        %c0_30 = arith.constant 0 : index
        %51 = vector.load %arg19[%c0_29, %c0_30] : memref<32x1xf32, #tpu.memory_space<vmem>>, vector<32x1xf32>
        %52 = arith.mulf %45, %45 : vector<32x128xf32>
        %cst_31 = arith.constant dense<0.000000e+00> : vector<32xf32>
        %53 = vector.multi_reduction <add>, %52, %cst_31 [1] : vector<32x128xf32> to vector<32xf32>
        %54 = vector.shape_cast %53 : vector<32xf32> to vector<32x1xf32>
        %55 = arith.addf %51, %54 : vector<32x1xf32>
        %c0_32 = arith.constant 0 : index
        %c0_33 = arith.constant 0 : index
        %56 = vector.load %arg19[%c0_32, %c0_33] : memref<32x1xf32, #tpu.memory_space<vmem>>, vector<32x1xf32>
        tpu.vector_store %arg19[%c0_32, %c0_33], %55 {strides = array<i32>} : memref<32x1xf32, #tpu.memory_space<vmem>>, vector<32x1xf32>,
        %c0_i32_34 = arith.constant 0 : i32
        %57 = arith.cmpi eq, %arg1, %c0_i32_34 : i32
        %58 = arith.extui %57 : i1 to i32
        %c0_i32_35 = arith.constant 0 : i32
        %59 = arith.cmpi ne, %58, %c0_i32_35 : i32
        scf.if %59 {
          %c0_36 = arith.constant 0 : index
          %c0_37 = arith.constant 0 : index
          %60 = vector.load %arg18[%c0_36, %c0_37] : memref<32x1xf32, #tpu.memory_space<vmem>>, vector<32x1xf32>
          %cst_38 = arith.constant 1.250000e-01 : f32
          %61 = vector.broadcast %cst_38 : f32 to vector<32x1xf32>
          %62 = arith.mulf %60, %61 : vector<32x1xf32>
          %c0_39 = arith.constant 0 : index
          %c0_40 = arith.constant 0 : index
          %63 = vector.load %arg19[%c0_39, %c0_40] : memref<32x1xf32, #tpu.memory_space<vmem>>, vector<32x1xf32>
          %cst_41 = arith.constant 1.250000e-01 : f32
          %64 = vector.broadcast %cst_41 : f32 to vector<32x1xf32>
          %65 = arith.mulf %63, %64 : vector<32x1xf32>
          %66 = arith.mulf %62, %62 : vector<32x1xf32>
          %67 = arith.subf %65, %66 : vector<32x1xf32>
          %cst_42 = arith.constant 9.99999974E-6 : f32
          %68 = vector.broadcast %cst_42 : f32 to vector<32x1xf32>
          %69 = arith.addf %67, %68 : vector<32x1xf32>
          %70 = math.rsqrt %69 : vector<32x1xf32>
          %c0_43 = arith.constant 0 : index
          %c0_44 = arith.constant 0 : index
          %71 = vector.load %arg9[%c0_43, %c0_44] : memref<32x1xf32, #tpu.memory_space<vmem>>, vector<32x1xf32>
          %72 = arith.mulf %70, %71 : vector<32x1xf32>
          %c0_45 = arith.constant 0 : index
          %c0_46 = arith.constant 0 : index
          %73 = vector.load %arg20[%c0_45, %c0_46] : memref<32x1xf32, #tpu.memory_space<vmem>>, vector<32x1xf32>
          tpu.vector_store %arg20[%c0_45, %c0_46], %72 {strides = array<i32>} : memref<32x1xf32, #tpu.memory_space<vmem>>, vector<32x1xf32>,
          %c0_47 = arith.constant 0 : index
          %c0_48 = arith.constant 0 : index
          %74 = vector.load %arg10[%c0_47, %c0_48] : memref<32x1xf32, #tpu.memory_space<vmem>>, vector<32x1xf32>
          %75 = arith.mulf %62, %72 : vector<32x1xf32>
          %76 = arith.subf %74, %75 : vector<32x1xf32>
          %c0_49 = arith.constant 0 : index
          %c0_50 = arith.constant 0 : index
          %77 = vector.load %arg21[%c0_49, %c0_50] : memref<32x1xf32, #tpu.memory_space<vmem>>, vector<32x1xf32>
          tpu.vector_store %arg21[%c0_49, %c0_50], %76 {strides = array<i32>} : memref<32x1xf32, #tpu.memory_space<vmem>>, vector<32x1xf32>,
        } else {
        }
      } else {
      }
      %c2_i32_21 = arith.constant 2 : i32
      %39 = arith.cmpi eq, %arg0, %c2_i32_21 : i32
      %40 = arith.extui %39 : i1 to i32
      %c0_i32_22 = arith.constant 0 : i32
      %41 = arith.cmpi ne, %40, %c0_i32_22 : i32
      scf.if %41 {
        %c0_23 = arith.constant 0 : index
        %c0_24 = arith.constant 0 : index
        %42 = vector.load %arg20[%c0_23, %c0_24] : memref<32x1xf32, #tpu.memory_space<vmem>>, vector<32x1xf32>
        %43 = vector.broadcast %42 : vector<32x1xf32> to vector<32x128xf32>
        %44 = arith.mulf %35, %43 : vector<32x128xf32>
        %c0_25 = arith.constant 0 : index
        %c0_26 = arith.constant 0 : index
        %45 = vector.load %arg21[%c0_25, %c0_26] : memref<32x1xf32, #tpu.memory_space<vmem>>, vector<32x1xf32>
        %46 = vector.broadcast %45 : vector<32x1xf32> to vector<32x128xf32>
        %47 = arith.addf %44, %46 : vector<32x128xf32>
        %c0_27 = arith.constant 0 : index
        %c0_28 = arith.constant 0 : index
        %48 = vector.load %arg11[%c0_27, %c0_28] : memref<4x32xf32, #tpu.memory_space<vmem>>, vector<4x32xf32>
        %cst_29 = arith.constant dense<0.000000e+00> : vector<4x128xf32>
        %49 = tpu.matmul %48, %47, %cst_29 {dimension_numbers = #tpu.dot_dimension_numbers<[1], [0], [0], [1], [0, 0, 1, 1], [], []>} : vector<4x32xf32>, vector<32x128xf32>, vector<4x128xf32> -> vector<4x128xf32>
        %c0_30 = arith.constant 0 : index
        %c0_31 = arith.constant 0 : index
        %50 = vector.load %arg12[%c0_30, %c0_31] : memref<4x1xf32, #tpu.memory_space<vmem>>, vector<4x1xf32>
        %51 = vector.broadcast %50 : vector<4x1xf32> to vector<4x128xf32>
        %52 = arith.addf %49, %51 : vector<4x128xf32>
        %53 = arith.negf %52 : vector<4x128xf32>
        %54 = math.exp %53 : vector<4x128xf32>
        %cst_32 = arith.constant 1.000000e+00 : f32
        %55 = vector.broadcast %cst_32 : f32 to vector<4x128xf32>
        %56 = arith.addf %55, %54 : vector<4x128xf32>
        %57 = arith.divf %55, %56 : vector<4x128xf32>
        %c0_33 = arith.constant 0 : index
        %c0_34 = arith.constant 0 : index
        %58 = vector.load %arg13[%c0_33, %c0_34] : memref<4x128xf32, #tpu.memory_space<vmem>>, vector<4x128xf32>
        tpu.vector_store %arg13[%c0_33, %c0_34], %57 {strides = array<i32>} : memref<4x128xf32, #tpu.memory_space<vmem>>, vector<4x128xf32>,
      } else {
      }
    } else {
    }
    %c2_i32 = arith.constant 2 : i32
    %20 = arith.cmpi ne, %arg0, %c2_i32 : i32
    %21 = arith.extui %20 : i1 to i32
    %c0_i32_8 = arith.constant 0 : i32
    %22 = arith.cmpi ne, %21, %c0_i32_8 : i32
    scf.if %22 {
      %cst_9 = arith.constant 0.000000e+00 : f32
      %23 = vector.broadcast %cst_9 : f32 to vector<4x128xf32>
      %c0_10 = arith.constant 0 : index
      %c0_11 = arith.constant 0 : index
      %24 = vector.load %arg13[%c0_10, %c0_11] : memref<4x128xf32, #tpu.memory_space<vmem>>, vector<4x128xf32>
      tpu.vector_store %arg13[%c0_10, %c0_11], %23 {strides = array<i32>} : memref<4x128xf32, #tpu.memory_space<vmem>>, vector<4x128xf32>,
    } else {
    }
    return
  }
  func.func @transform_0(%arg0: i32, %arg1: i32) -> (i32, i32) {
    %c0_i32 = arith.constant 0 : i32
    %c0_i32_0 = arith.constant 0 : i32
    return %c0_i32, %arg1 : i32, i32
  }
  func.func @transform_1(%arg0: i32, %arg1: i32) -> (i32, i32) {
    %c0_i32 = arith.constant 0 : i32
    %c0_i32_0 = arith.constant 0 : i32
    %c0_i32_1 = arith.constant 0 : i32
    return %c0_i32, %c0_i32_0 : i32, i32
  }
  func.func @transform_2(%arg0: i32, %arg1: i32) -> (i32, i32) {
    %c0_i32 = arith.constant 0 : i32
    %c0_i32_0 = arith.constant 0 : i32
    %c0_i32_1 = arith.constant 0 : i32
    return %c0_i32, %c0_i32_0 : i32, i32
  }
  func.func @transform_3(%arg0: i32, %arg1: i32) -> (i32, i32) {
    %c0_i32 = arith.constant 0 : i32
    %c0_i32_0 = arith.constant 0 : i32
    %c0_i32_1 = arith.constant 0 : i32
    return %c0_i32, %c0_i32_0 : i32, i32
  }
  func.func @transform_4(%arg0: i32, %arg1: i32) -> (i32, i32) {
    %c0_i32 = arith.constant 0 : i32
    %c0_i32_0 = arith.constant 0 : i32
    %c0_i32_1 = arith.constant 0 : i32
    return %c0_i32, %c0_i32_0 : i32, i32
  }
  func.func @transform_5(%arg0: i32, %arg1: i32) -> (i32, i32) {
    %c0_i32 = arith.constant 0 : i32
    %c0_i32_0 = arith.constant 0 : i32
    %c0_i32_1 = arith.constant 0 : i32
    return %c0_i32, %c0_i32_0 : i32, i32
  }
  func.func @transform_6(%arg0: i32, %arg1: i32) -> (i32, i32) {
    %c0_i32 = arith.constant 0 : i32
    %c0_i32_0 = arith.constant 0 : i32
    %c0_i32_1 = arith.constant 0 : i32
    return %c0_i32, %c0_i32_0 : i32, i32
  }
  func.func @transform_7(%arg0: i32, %arg1: i32) -> (i32, i32) {
    %c0_i32 = arith.constant 0 : i32
    %c0_i32_0 = arith.constant 0 : i32
    %c0_i32_1 = arith.constant 0 : i32
    return %c0_i32, %c0_i32_0 : i32, i32
  }
  func.func @transform_8(%arg0: i32, %arg1: i32) -> (i32, i32) {
    %c0_i32 = arith.constant 0 : i32
    %c0_i32_0 = arith.constant 0 : i32
    %c0_i32_1 = arith.constant 0 : i32
    return %c0_i32, %c0_i32_0 : i32, i32
  }
  func.func @transform_9(%arg0: i32, %arg1: i32) -> (i32, i32) {
    %c0_i32 = arith.constant 0 : i32
    %c0_i32_0 = arith.constant 0 : i32
    %c0_i32_1 = arith.constant 0 : i32
    return %c0_i32, %c0_i32_0 : i32, i32
  }
  func.func @transform_10(%arg0: i32, %arg1: i32) -> (i32, i32) {
    %c0_i32 = arith.constant 0 : i32
    %c0_i32_0 = arith.constant 0 : i32
    %c0_i32_1 = arith.constant 0 : i32
    return %c0_i32, %c0_i32_0 : i32, i32
  }
  func.func @transform_11(%arg0: i32, %arg1: i32) -> (i32, i32) {
    %c0_i32 = arith.constant 0 : i32
    %c0_i32_0 = arith.constant 0 : i32
    return %c0_i32, %arg1 : i32, i32
  }
}

</mosaic_0001>

<llo_original>
// kernel: tpu_custom_call.1
$region0: #{tpu_custom_call.1}
  #allocation0 [shape = 'u32[]', space=smem, size = 0x4, offset = 0x4, fixed_abs, tag = 'smem constant byte address 0x4 - core index']
  #allocation1 [shape = 'u32[72,128]{1,0:T(1,128)}', space=vmem, size = 0x9000, scoped, tag = 'internal scratch']
  #allocation2 [shape = 'f32[64,1]{1,0:T(8,128)}', space=vmem, size = 0x8000, scoped, tag = 'scratch operand']
  #allocation3 [shape = 'f32[64,1]{1,0:T(8,128)}', space=vmem, size = 0x8000, scoped, tag = 'scratch operand']
  #allocation4 [shape = 'f32[64,1]{1,0:T(8,128)}', space=vmem, size = 0x8000, scoped, tag = 'scratch operand']
  #allocation5 [shape = 'f32[64,1]{1,0:T(8,128)}', space=vmem, size = 0x8000, scoped, tag = 'scratch operand']
  #allocation6 [shape = 'f32[32,1]{1,0:T(8,128)}', space=vmem, size = 0x4000, scoped, tag = 'scratch operand']
  #allocation7 [shape = 'f32[32,1]{1,0:T(8,128)}', space=vmem, size = 0x4000, scoped, tag = 'scratch operand']
  #allocation8 [shape = 'f32[32,1]{1,0:T(8,128)}', space=vmem, size = 0x4000, scoped, tag = 'scratch operand']
  #allocation9 [shape = 'f32[32,1]{1,0:T(8,128)}', space=vmem, size = 0x4000, scoped, tag = 'scratch operand']
  %s0 = inlined_call_operand.vmem [shape: f32[16,128], index: 0, kind: input, shape index: {}]
  %s1 = inlined_call_operand.vmem [shape: f32[64,16], index: 1, kind: input, shape index: {}]
  %s2 = inlined_call_operand.vmem [shape: f32[64,1], index: 2, kind: input, shape index: {}]
  %s3 = inlined_call_operand.vmem [shape: f32[64,1], index: 3, kind: input, shape index: {}]
  %s4 = inlined_call_operand.vmem [shape: f32[64,1], index: 4, kind: input, shape index: {}]
  %s5 = inlined_call_operand.vmem [shape: f32[32,64], index: 5, kind: input, shape index: {}]
  %s6 = inlined_call_operand.vmem [shape: f32[32,1], index: 6, kind: input, shape index: {}]
  %s7 = inlined_call_operand.vmem [shape: f32[32,1], index: 7, kind: input, shape index: {}]
  %s8 = inlined_call_operand.vmem [shape: f32[32,1], index: 8, kind: input, shape index: {}]
  %s9 = inlined_call_operand.vmem [shape: f32[4,32], index: 9, kind: input, shape index: {}]
  %s10 = inlined_call_operand.vmem [shape: f32[4,1], index: 10, kind: input, shape index: {}]
  %s11 = inlined_call_operand.hbm [shape: f32[4,128], index: 11, kind: output, shape index: {}]
  %s12 = sld [smem:[#allocation0]]
  $region109: #{tpu_custom_call.1} parent=0
    _
  %s14 = ssub.s32 1, %s12
  %s15 = scalar_select 0, %s14, %s12
  $region1: #{tpu_custom_call.1} parent=0
    #allocation10 [shape = 'u8[2048]{0}', space=vmem, size = 0x800, scoped, tag = 'output window, operand 0, single buffered']
    #allocation11 [shape = 's32[2]{0}', space=sflag, size = 0x8, scoped, tag = 'scoped memory for tpu_custom_call.1']
    %16 = vsyncpa [#allocation11], 0
    loop: start=0, step=1, limit=5
    $region2: #{tpu_custom_call.1} parent=1 // loop_pre_header
      _
    $region3: #{tpu_custom_call.1} parent=1 // loop_header
      %s18 = sphi 0, %s22
      %p19 = scmp.ge.s32.totalorder %s18, 5
      %s25 = sphi 0, %s37
      %s26 = sphi 0, %s33
      %s27 = sphi 0, %s25
      %s28 = sphi 0, %s26
      %s29 = sphi 0, %s27
      %s30 = sphi 0, %s28
      %s40 = sphi 0, %s42
      %s43 = sphi 0, %s40
      %s44 = sphi 0, %s43
      %s60 = sphi 0, %s44
      %s64 = sphi 0, %s64
      %s66 = sphi 0, %s64
      %s67 = sphi 0, %s66
      %s81 = sphi 0, %s67
      %s85 = sphi 0, %s85
      %s87 = sphi 0, %s85
      %s88 = sphi 0, %s87
      %s102 = sphi 0, %s88
      %s106 = sphi 0, %s106
      %s108 = sphi 0, %s106
      %s109 = sphi 0, %s108
      %s123 = sphi 0, %s109
      %s127 = sphi 0, %s127
      %s129 = sphi 0, %s127
      %s130 = sphi 0, %s129
      %s144 = sphi 0, %s130
      %s148 = sphi 0, %s148
      %s150 = sphi 0, %s148
      %s151 = sphi 0, %s150
      %s165 = sphi 0, %s151
      %s169 = sphi 0, %s169
      %s171 = sphi 0, %s169
      %s172 = sphi 0, %s171
      %s186 = sphi 0, %s172
      %s190 = sphi 0, %s190
      %s192 = sphi 0, %s190
      %s193 = sphi 0, %s192
      %s207 = sphi 0, %s193
      %s211 = sphi 0, %s211
      %s213 = sphi 0, %s211
      %s214 = sphi 0, %s213
      %s228 = sphi 0, %s214
      %s232 = sphi 0, %s232
      %s234 = sphi 0, %s232
      %s235 = sphi 0, %s234
      %s249 = sphi 0, %s235
      %s253 = sphi 0, %s253
      %s255 = sphi 0, %s253
      %s256 = sphi 0, %s255
      %s270 = sphi 0, %s256
      %s276 = sphi 0, %s278
      %s279 = sphi 0, %s276
      %s280 = sphi 0, %s279
      %s296 = sphi 0, %s280
    $region4: #{tpu_custom_call.1} parent=1 // loop_header_branch
      %21 = sbr.rel (%p19) target = $region8
    $region5: #{tpu_custom_call.1} parent=1 // loop_body
      %s23 = ssub.s32 %s18, 1
      %s24 = ssub.s32 %s18, 2
      %s31 = sadd.s32 1, %s26
      %p32 = scmp.ge.s32.totalorder %s31, 1
      %s33 = scalar_select %p32, 0, %s31
      %s34 = sadd.s32 1, %s25
      %s35 = scalar_select %p32, %s34, %s25
      %p36 = scmp.ge.s32.totalorder %s35, 3
      %s37 = scalar_select %p36, 0, %s35
      %s38 = ssub.s32 %s26, %s33
      %p39 = scmp.eq.s32.totalorder %s38, 0
      %s41 = sadd.s32 %s40, 1
      %s42 = scalar_select %p39, %s40, %s41
      %p45 = pneg %p39
      %p46 = scmp.eq.s32.totalorder %s18, 2
      %p47 = por %p45, %p46
      %p48 = scmp.ne.s32.totalorder %s40, %s43
      %p49 = scmp.eq.s32.totalorder %s18, 0
      %p50 = por %p48, %p49
      %p51 = scmp.ne.s32.totalorder %s40, %s43
      %p52 = scmp.eq.s32.totalorder %s23, 2
      %p53 = por %p51, %p52
      %p54 = scmp.ne.s32.totalorder %s43, %s44
      %p55 = scmp.eq.s32.totalorder %s23, 0
      %p56 = por %p54, %p55
      %p57 = scmp.ne.s32.totalorder %s43, %s44
      %p58 = scmp.eq.s32.totalorder %s24, 2
      %p59 = por %p57, %p58
      %p61 = scmp.ne.s32.totalorder %s44, %s60
      %p62 = scmp.eq.s32.totalorder %s24, 0
      %p63 = por %p61, %p62
      %s65 = sadd.s32 %s64, 1
      %p68 = scmp.eq.s32.totalorder %s18, 2
      %p69 = scmp.ne.s32.totalorder %s64, %s66
      %p70 = scmp.eq.s32.totalorder %s18, 0
      %p71 = por %p69, %p70
      %p72 = scmp.ne.s32.totalorder %s64, %s66
      %p73 = scmp.eq.s32.totalorder %s23, 2
      %p74 = por %p72, %p73
      %p75 = scmp.ne.s32.totalorder %s66, %s67
      %p76 = scmp.eq.s32.totalorder %s23, 0
      %p77 = por %p75, %p76
      %p78 = scmp.ne.s32.totalorder %s66, %s67
      %p79 = scmp.eq.s32.totalorder %s24, 2
      %p80 = por %p78, %p79
      %p82 = scmp.ne.s32.totalorder %s67, %s81
      %p83 = scmp.eq.s32.totalorder %s24, 0
      %p84 = por %p82, %p83
      %s86 = sadd.s32 %s85, 1
      %p89 = scmp.eq.s32.totalorder %s18, 2
      %p90 = scmp.ne.s32.totalorder %s85, %s87
      %p91 = scmp.eq.s32.totalorder %s18, 0
      %p92 = por %p90, %p91
      %p93 = scmp.ne.s32.totalorder %s85, %s87
      %p94 = scmp.eq.s32.totalorder %s23, 2
      %p95 = por %p93, %p94
      %p96 = scmp.ne.s32.totalorder %s87, %s88
      %p97 = scmp.eq.s32.totalorder %s23, 0
      %p98 = por %p96, %p97
      %p99 = scmp.ne.s32.totalorder %s87, %s88
      %p100 = scmp.eq.s32.totalorder %s24, 2
      %p101 = por %p99, %p100
      %p103 = scmp.ne.s32.totalorder %s88, %s102
      %p104 = scmp.eq.s32.totalorder %s24, 0
      %p105 = por %p103, %p104
      %s107 = sadd.s32 %s106, 1
      %p110 = scmp.eq.s32.totalorder %s18, 2
      %p111 = scmp.ne.s32.totalorder %s106, %s108
      %p112 = scmp.eq.s32.totalorder %s18, 0
      %p113 = por %p111, %p112
      %p114 = scmp.ne.s32.totalorder %s106, %s108
      %p115 = scmp.eq.s32.totalorder %s23, 2
      %p116 = por %p114, %p115
      %p117 = scmp.ne.s32.totalorder %s108, %s109
      %p118 = scmp.eq.s32.totalorder %s23, 0
      %p119 = por %p117, %p118
      %p120 = scmp.ne.s32.totalorder %s108, %s109
      %p121 = scmp.eq.s32.totalorder %s24, 2
      %p122 = por %p120, %p121
      %p124 = scmp.ne.s32.totalorder %s109, %s123
      %p125 = scmp.eq.s32.totalorder %s24, 0
      %p126 = por %p124, %p125
      %s128 = sadd.s32 %s127, 1
      %p131 = scmp.eq.s32.totalorder %s18, 2
      %p132 = scmp.ne.s32.totalorder %s127, %s129
      %p133 = scmp.eq.s32.totalorder %s18, 0
      %p134 = por %p132, %p133
      %p135 = scmp.ne.s32.totalorder %s127, %s129
      %p136 = scmp.eq.s32.totalorder %s23, 2
      %p137 = por %p135, %p136
      %p138 = scmp.ne.s32.totalorder %s129, %s130
      %p139 = scmp.eq.s32.totalorder %s23, 0
      %p140 = por %p138, %p139
      %p141 = scmp.ne.s32.totalorder %s129, %s130
      %p142 = scmp.eq.s32.totalorder %s24, 2
      %p143 = por %p141, %p142
      %p145 = scmp.ne.s32.totalorder %s130, %s144
      %p146 = scmp.eq.s32.totalorder %s24, 0
      %p147 = por %p145, %p146
      %s149 = sadd.s32 %s148, 1
      %p152 = scmp.eq.s32.totalorder %s18, 2
      %p153 = scmp.ne.s32.totalorder %s148, %s150
      %p154 = scmp.eq.s32.totalorder %s18, 0
      %p155 = por %p153, %p154
      %p156 = scmp.ne.s32.totalorder %s148, %s150
      %p157 = scmp.eq.s32.totalorder %s23, 2
      %p158 = por %p156, %p157
      %p159 = scmp.ne.s32.totalorder %s150, %s151
      %p160 = scmp.eq.s32.totalorder %s23, 0
      %p161 = por %p159, %p160
      %p162 = scmp.ne.s32.totalorder %s150, %s151
      %p163 = scmp.eq.s32.totalorder %s24, 2
      %p164 = por %p162, %p163
      %p166 = scmp.ne.s32.totalorder %s151, %s165
      %p167 = scmp.eq.s32.totalorder %s24, 0
      %p168 = por %p166, %p167
      %s170 = sadd.s32 %s169, 1
      %p173 = scmp.eq.s32.totalorder %s18, 2
      %p174 = scmp.ne.s32.totalorder %s169, %s171
      %p175 = scmp.eq.s32.totalorder %s18, 0
      %p176 = por %p174, %p175
      %p177 = scmp.ne.s32.totalorder %s169, %s171
      %p178 = scmp.eq.s32.totalorder %s23, 2
      %p179 = por %p177, %p178
      %p180 = scmp.ne.s32.totalorder %s171, %s172
      %p181 = scmp.eq.s32.totalorder %s23, 0
      %p182 = por %p180, %p181
      %p183 = scmp.ne.s32.totalorder %s171, %s172
      %p184 = scmp.eq.s32.totalorder %s24, 2
      %p185 = por %p183, %p184
      %p187 = scmp.ne.s32.totalorder %s172, %s186
      %p188 = scmp.eq.s32.totalorder %s24, 0
      %p189 = por %p187, %p188
      %s191 = sadd.s32 %s190, 1
      %p194 = scmp.eq.s32.totalorder %s18, 2
      %p195 = scmp.ne.s32.totalorder %s190, %s192
      %p196 = scmp.eq.s32.totalorder %s18, 0
      %p197 = por %p195, %p196
      %p198 = scmp.ne.s32.totalorder %s190, %s192
      %p199 = scmp.eq.s32.totalorder %s23, 2
      %p200 = por %p198, %p199
      %p201 = scmp.ne.s32.totalorder %s192, %s193
      %p202 = scmp.eq.s32.totalorder %s23, 0
      %p203 = por %p201, %p202
      %p204 = scmp.ne.s32.totalorder %s192, %s193
      %p205 = scmp.eq.s32.totalorder %s24, 2
      %p206 = por %p204, %p205
      %p208 = scmp.ne.s32.totalorder %s193, %s207
      %p209 = scmp.eq.s32.totalorder %s24, 0
      %p210 = por %p208, %p209
      %s212 = sadd.s32 %s211, 1
      %p215 = scmp.eq.s32.totalorder %s18, 2
      %p216 = scmp.ne.s32.totalorder %s211, %s213
      %p217 = scmp.eq.s32.totalorder %s18, 0
      %p218 = por %p216, %p217
      %p219 = scmp.ne.s32.totalorder %s211, %s213
      %p220 = scmp.eq.s32.totalorder %s23, 2
      %p221 = por %p219, %p220
      %p222 = scmp.ne.s32.totalorder %s213, %s214
      %p223 = scmp.eq.s32.totalorder %s23, 0
      %p224 = por %p222, %p223
      %p225 = scmp.ne.s32.totalorder %s213, %s214
      %p226 = scmp.eq.s32.totalorder %s24, 2
      %p227 = por %p225, %p226
      %p229 = scmp.ne.s32.totalorder %s214, %s228
      %p230 = scmp.eq.s32.totalorder %s24, 0
      %p231 = por %p229, %p230
      %s233 = sadd.s32 %s232, 1
      %p236 = scmp.eq.s32.totalorder %s18, 2
      %p237 = scmp.ne.s32.totalorder %s232, %s234
      %p238 = scmp.eq.s32.totalorder %s18, 0
      %p239 = por %p237, %p238
      %p240 = scmp.ne.s32.totalorder %s232, %s234
      %p241 = scmp.eq.s32.totalorder %s23, 2
      %p242 = por %p240, %p241
      %p243 = scmp.ne.s32.totalorder %s234, %s235
      %p244 = scmp.eq.s32.totalorder %s23, 0
      %p245 = por %p243, %p244
      %p246 = scmp.ne.s32.totalorder %s234, %s235
      %p247 = scmp.eq.s32.totalorder %s24, 2
      %p248 = por %p246, %p247
      %p250 = scmp.ne.s32.totalorder %s235, %s249
      %p251 = scmp.eq.s32.totalorder %s24, 0
      %p252 = por %p250, %p251
      %s254 = sadd.s32 %s253, 1
      %p257 = scmp.eq.s32.totalorder %s18, 2
      %p258 = scmp.ne.s32.totalorder %s253, %s255
      %p259 = scmp.eq.s32.totalorder %s18, 0
      %p260 = por %p258, %p259
      %p261 = scmp.ne.s32.totalorder %s253, %s255
      %p262 = scmp.eq.s32.totalorder %s23, 2
      %p263 = por %p261, %p262
      %p264 = scmp.ne.s32.totalorder %s255, %s256
      %p265 = scmp.eq.s32.totalorder %s23, 0
      %p266 = por %p264, %p265
      %p267 = scmp.ne.s32.totalorder %s255, %s256
      %p268 = scmp.eq.s32.totalorder %s24, 2
      %p269 = por %p267, %p268
      %p271 = scmp.ne.s32.totalorder %s256, %s270
      %p272 = scmp.eq.s32.totalorder %s24, 0
      %p273 = por %p271, %p272
      %s274 = ssub.s32 %s26, %s33
      %p275 = scmp.eq.s32.totalorder %s274, 0
      %s277 = sadd.s32 %s276, 1
      %s278 = scalar_select %p275, %s276, %s277
      %p281 = pneg %p275
      %p282 = scmp.eq.s32.totalorder %s18, 2
      %p283 = por %p281, %p282
      %p284 = scmp.ne.s32.totalorder %s276, %s279
      %p285 = scmp.eq.s32.totalorder %s18, 0
      %p286 = por %p284, %p285
      %p287 = scmp.ne.s32.totalorder %s276, %s279
      %p288 = scmp.eq.s32.totalorder %s23, 2
      %p289 = por %p287, %p288
      %p290 = scmp.ne.s32.totalorder %s279, %s280
      %p291 = scmp.eq.s32.totalorder %s23, 0
      %p292 = por %p290, %p291
      %p293 = scmp.ne.s32.totalorder %s279, %s280
      %p294 = scmp.eq.s32.totalorder %s24, 2
      %p295 = por %p293, %p294
      %p297 = scmp.ne.s32.totalorder %s280, %s296
      %p298 = scmp.eq.s32.totalorder %s24, 0
      %p299 = por %p297, %p298
      %p300 = scmp.le.s32.totalorder 1, %s18
      %p301 = scmp.lt.s32.totalorder %s18, 4
      %p302 = pnand %p300, %p301
      %p303 = pneg %p302
      // Predicated region
      $region9: #{tpu_custom_call.1} parent=5 // pred_check
        _
      $region10: #{tpu_custom_call.1} parent=5 // pred_check_branch
        %305 = sbr.rel (%p302) target = $region12
      $region11: #{tpu_custom_call.1} parent=5 // pred_region
        %s306 = ssub.s32 %s18, 1
        // Predicated region
        $region13: #{tpu_custom_call.1} parent=11 // pred_check
          %p307 = pneg %p56
        $region14: #{tpu_custom_call.1} parent=11 // pred_check_branch
          %309 = sbr.rel (%p307) target = $region16
        $region15: #{tpu_custom_call.1} parent=11 // pred_region
          %p310 = scmp.lt.s32.totalorder %s28, 0
          %s311 = scalar_select %p310, %s28, 0
          %s312 = smul.addr %s311, 8
          %s313 = scalar_lea.vmem %s0, %s312
        $region16: #{tpu_custom_call.1} parent=11 // pred_fallthru
          _
        // Predicated region
        $region17: #{tpu_custom_call.1} parent=11 // pred_check
          %p314 = pneg %p77
        $region18: #{tpu_custom_call.1} parent=11 // pred_check_branch
          %316 = sbr.rel (%p314) target = $region20
        $region19: #{tpu_custom_call.1} parent=11 // pred_region
          _
        $region20: #{tpu_custom_call.1} parent=11 // pred_fallthru
          _
        // Predicated region
        $region21: #{tpu_custom_call.1} parent=11 // pred_check
          %p317 = pneg %p98
        $region22: #{tpu_custom_call.1} parent=11 // pred_check_branch
          %319 = sbr.rel (%p317) target = $region24
        $region23: #{tpu_custom_call.1} parent=11 // pred_region
          _
        $region24: #{tpu_custom_call.1} parent=11 // pred_fallthru
          _
        // Predicated region
        $region25: #{tpu_custom_call.1} parent=11 // pred_check
          %p320 = pneg %p119
        $region26: #{tpu_custom_call.1} parent=11 // pred_check_branch
          %322 = sbr.rel (%p320) target = $region28
        $region27: #{tpu_custom_call.1} parent=11 // pred_region
          _
        $region28: #{tpu_custom_call.1} parent=11 // pred_fallthru
          _
        // Predicated region
        $region29: #{tpu_custom_call.1} parent=11 // pred_check
          %p323 = pneg %p140
        $region30: #{tpu_custom_call.1} parent=11 // pred_check_branch
          %325 = sbr.rel (%p323) target = $region32
        $region31: #{tpu_custom_call.1} parent=11 // pred_region
          _
        $region32: #{tpu_custom_call.1} parent=11 // pred_fallthru
          _
        // Predicated region
        $region33: #{tpu_custom_call.1} parent=11 // pred_check
          %p326 = pneg %p161
        $region34: #{tpu_custom_call.1} parent=11 // pred_check_branch
          %328 = sbr.rel (%p326) target = $region36
        $region35: #{tpu_custom_call.1} parent=11 // pred_region
          _
        $region36: #{tpu_custom_call.1} parent=11 // pred_fallthru
          _
        // Predicated region
        $region37: #{tpu_custom_call.1} parent=11 // pred_check
          %p329 = pneg %p182
        $region38: #{tpu_custom_call.1} parent=11 // pred_check_branch
          %331 = sbr.rel (%p329) target = $region40
        $region39: #{tpu_custom_call.1} parent=11 // pred_region
          _
        $region40: #{tpu_custom_call.1} parent=11 // pred_fallthru
          _
        // Predicated region
        $region41: #{tpu_custom_call.1} parent=11 // pred_check
          %p332 = pneg %p203
        $region42: #{tpu_custom_call.1} parent=11 // pred_check_branch
          %334 = sbr.rel (%p332) target = $region44
        $region43: #{tpu_custom_call.1} parent=11 // pred_region
          _
        $region44: #{tpu_custom_call.1} parent=11 // pred_fallthru
          _
        // Predicated region
        $region45: #{tpu_custom_call.1} parent=11 // pred_check
          %p335 = pneg %p224
        $region46: #{tpu_custom_call.1} parent=11 // pred_check_branch
          %337 = sbr.rel (%p335) target = $region48
        $region47: #{tpu_custom_call.1} parent=11 // pred_region
          _
        $region48: #{tpu_custom_call.1} parent=11 // pred_fallthru
          _
        // Predicated region
        $region49: #{tpu_custom_call.1} parent=11 // pred_check
          %p338 = pneg %p245
        $region50: #{tpu_custom_call.1} parent=11 // pred_check_branch
          %340 = sbr.rel (%p338) target = $region52
        $region51: #{tpu_custom_call.1} parent=11 // pred_region
          _
        $region52: #{tpu_custom_call.1} parent=11 // pred_fallthru
          _
        // Predicated region
        $region53: #{tpu_custom_call.1} parent=11 // pred_check
          %p341 = pneg %p266
        $region54: #{tpu_custom_call.1} parent=11 // pred_check_branch
          %343 = sbr.rel (%p341) target = $region56
        $region55: #{tpu_custom_call.1} parent=11 // pred_region
          _
        $region56: #{tpu_custom_call.1} parent=11 // pred_fallthru
          _
      $region12: #{tpu_custom_call.1} parent=5 // pred_fallthru
        _
      %p344 = scmp.lt.s32.totalorder %s18, 3
      // Predicated region
      $region57: #{tpu_custom_call.1} parent=5 // pred_check
        %p345 = pneg %p344
      $region58: #{tpu_custom_call.1} parent=5 // pred_check_branch
        %347 = sbr.rel (%p345) target = $region60
      $region59: #{tpu_custom_call.1} parent=5 // pred_region
        _
      $region60: #{tpu_custom_call.1} parent=5 // pred_fallthru
        _
      %p348 = scmp.le.s32.totalorder 1, %s18
      %p349 = scmp.lt.s32.totalorder %s18, 4
      %p350 = pnand %p348, %p349
      %p351 = pneg %p350
      // Predicated region
      $region61: #{tpu_custom_call.1} parent=5 // pred_check
        _
      $region62: #{tpu_custom_call.1} parent=5 // pred_check_branch
        %353 = sbr.rel (%p350) target = $region64
      $region63: #{tpu_custom_call.1} parent=5 // pred_region
        %s354 = ssub.s32 %s18, 1
        %p355 = scmp.lt.s32.totalorder %s28, 0
        %s356 = scalar_select %p355, %s28, 0
        %s357 = smul.addr %s356, 8
        %s358 = scalar_lea.vmem %s0, %s357
        %p359 = pneg %p56
        %p360 = pneg %p53
        %p361 = pneg %p77
        %p362 = pneg %p74
        %p363 = pneg %p98
        %p364 = pneg %p95
        %p365 = pneg %p119
        %p366 = pneg %p116
        %p367 = pneg %p140
        %p368 = pneg %p137
        %p369 = pneg %p161
        %p370 = pneg %p158
        %p371 = pneg %p182
        %p372 = pneg %p179
        %p373 = pneg %p203
        %p374 = pneg %p200
        %p375 = pneg %p224
        %p376 = pneg %p221
        %p377 = pneg %p245
        %p378 = pneg %p242
        %p379 = pneg %p266
        %p380 = pneg %p263
        %p381 = pneg %p292
        %p382 = pneg %p289
        %p383 = scmp.lt.s32.totalorder %s28, 0
        %s384 = scalar_select %p383, %s28, 0
        %s385 = smul.addr %s384, 8
        %s386 = scalar_lea.vmem %s0, %s385
        %s387 = smul.u32 %s28, 128
        %v388 = vlaneseq
        %v389 = vand.u32 %v388, 127
        %v390 = vstv %s387
        %v391 = vadd.s32 %v390, %v389
        %vm392 = vcmp.lt.s32.totalorder %v391, 8
        %v393 = vld [vmem:[%s386] sm:$0xff]
        %v394 = vld [vmem:[%s386 + $0x8] sm:$0xff]
        %v395 = vld [vmem:[%s1] sm:$0xff]
        %v396 = vld [vmem:[%s1 + $0x8] sm:$0xff]
        %v397 = vld [vmem:[%s1 + $0x10] sm:$0xff]
        %v398 = vld [vmem:[%s1 + $0x18] sm:$0xff]
        %v399 = vld [vmem:[%s1 + $0x20] sm:$0xff]
        %v400 = vld [vmem:[%s1 + $0x28] sm:$0xff]
        %v401 = vld [vmem:[%s1 + $0x30] sm:$0xff]
        %v402 = vld [vmem:[%s1 + $0x38] sm:$0xff]
        %v403 = vld [vmem:[%s2] sm:$0xff]
        %v404 = vld [vmem:[%s2 + $0x8] sm:$0xff]
        %v405 = vld [vmem:[%s2 + $0x10] sm:$0xff]
        %v406 = vld [vmem:[%s2 + $0x18] sm:$0xff]
        %v407 = vld [vmem:[%s2 + $0x20] sm:$0xff]
        %v408 = vld [vmem:[%s2 + $0x28] sm:$0xff]
        %v409 = vld [vmem:[%s2 + $0x30] sm:$0xff]
        %v410 = vld [vmem:[%s2 + $0x38] sm:$0xff]
        %412 = vset.pattern.permute.xlu0 0
        %413 = vperm.xlu0 %412, %v403
        %v414 = vpop.permute.xlu0 %413
        %417 = vset.pattern.permute.xlu0 0
        %418 = vperm.xlu0 %417, %v404
        %v419 = vpop.permute.xlu0 %418
        %422 = vset.pattern.permute.xlu0 0
        %423 = vperm.xlu0 %422, %v405
        %v424 = vpop.permute.xlu0 %423
        %427 = vset.pattern.permute.xlu0 0
        %428 = vperm.xlu0 %427, %v406
        %v429 = vpop.permute.xlu0 %428
        %432 = vset.pattern.permute.xlu0 0
        %433 = vperm.xlu0 %432, %v407
        %v434 = vpop.permute.xlu0 %433
        %437 = vset.pattern.permute.xlu0 0
        %438 = vperm.xlu0 %437, %v408
        %v439 = vpop.permute.xlu0 %438
        %442 = vset.pattern.permute.xlu0 0
        %443 = vperm.xlu0 %442, %v409
        %v444 = vpop.permute.xlu0 %443
        %447 = vset.pattern.permute.xlu0 0
        %448 = vperm.xlu0 %447, %v410
        %v449 = vpop.permute.xlu0 %448
        %vm451 = vcmask 130048
        %v453 = vsel %vm451, %v395, 0
        %v456 = vsel %vm451, %v396, 0
        %v459 = vsel %vm451, %v397, 0
        %v462 = vsel %vm451, %v398, 0
        %v465 = vsel %vm451, %v399, 0
        %v468 = vsel %vm451, %v400, 0
        %v471 = vsel %vm451, %v401, 0
        %v474 = vsel %vm451, %v402, 0
        %476 = vmatpush.msra.mxu0 0.0
        %477 = vmatpush.msra.mxu0 0.0
        %478 = vmatpush.msra.mxu0 0.0
        %479 = vmatpush.msra.mxu0 0.0
        %480 = vmatpush.msra.mxu0 0.0
        %481 = vmatpush.msra.mxu0 0.0
        %482 = vmatpush.msra.mxu0 0.0
        %483 = vmatpush.msra.mxu0 0.0
        %484 = vmatpush.msra.mxu0 0.0
        %485 = vmatpush.msra.mxu0 0.0
        %486 = vmatpush.msra.mxu0 0.0
        %487 = vmatpush.msra.mxu0 0.0
        %488 = vmatpush.msra.mxu0 0.0
        %489 = vmatpush.msra.mxu0 0.0
        %490 = vmatpush.msra.mxu0 %v394
        %491 = vmatpush.msra.mxu0 %v393
        %492 = vmatmul.f32.gmra.mxu0 %v453
        %v493 = vpop.f32.mrf.mxu0
        %v494 = vadd.f32 %v414, %v493
        %495 = vmatmul.f32.gmra.mxu0 %v456
        %v496 = vpop.f32.mrf.mxu0
        %v497 = vadd.f32 %v419, %v496
        %498 = vmatmul.f32.gmra.mxu0 %v459
        %v499 = vpop.f32.mrf.mxu0
        %v500 = vadd.f32 %v424, %v499
        %501 = vmatmul.f32.gmra.mxu0 %v462
        %v502 = vpop.f32.mrf.mxu0
        %v503 = vadd.f32 %v429, %v502
        %504 = vmatmul.f32.gmra.mxu0 %v465
        %v505 = vpop.f32.mrf.mxu0
        %v506 = vadd.f32 %v434, %v505
        %507 = vmatmul.f32.gmra.mxu0 %v468
        %v508 = vpop.f32.mrf.mxu0
        %v509 = vadd.f32 %v439, %v508
        %510 = vmatmul.f32.gmra.mxu0 %v471
        %v511 = vpop.f32.mrf.mxu0
        %v512 = vadd.f32 %v444, %v511
        %513 = vmatmul.f32.gmra.mxu0 %v474
        %v514 = vpop.f32.mrf.mxu0
        %v515 = vadd.f32 %v449, %v514
        %516 = vdwg.mxu0
        %v517 = vmax.f32 %v494, 0.0
        %v518 = vmax.f32 %v497, 0.0
        %v519 = vmax.f32 %v500, 0.0
        %v520 = vmax.f32 %v503, 0.0
        %v521 = vmax.f32 %v506, 0.0
        %v522 = vmax.f32 %v509, 0.0
        %v523 = vmax.f32 %v512, 0.0
        %v524 = vmax.f32 %v515, 0.0
        %p525 = scmp.eq.s32.totalorder %s27, 0
        // Predicated region
        $region65: #{tpu_custom_call.1} parent=63 // pred_check
          %p526 = pneg %p525
        $region66: #{tpu_custom_call.1} parent=63 // pred_check_branch
          %528 = sbr.rel (%p526) target = $region68
        $region67: #{tpu_custom_call.1} parent=63 // pred_region
          %p529 = scmp.eq.s32.totalorder %s28, 0
          // Predicated region
          $region69: #{tpu_custom_call.1} parent=67 // pred_check
            %p530 = pneg %p529
          $region70: #{tpu_custom_call.1} parent=67 // pred_check_branch
            %532 = sbr.rel (%p530) target = $region72
          $region71: #{tpu_custom_call.1} parent=67 // pred_region
            %vm533 = vcmask 7168
            %534 = vst.msk [vmem:[#allocation2] sm:$0xff] %vm533, 0.0
            %535 = vst.msk [vmem:[#allocation2 + $0x8] sm:$0xff] %vm533, 0.0
            %536 = vst.msk [vmem:[#allocation2 + $0x10] sm:$0xff] %vm533, 0.0
            %537 = vst.msk [vmem:[#allocation2 + $0x18] sm:$0xff] %vm533, 0.0
            %538 = vst.msk [vmem:[#allocation2 + $0x20] sm:$0xff] %vm533, 0.0
            %539 = vst.msk [vmem:[#allocation2 + $0x28] sm:$0xff] %vm533, 0.0
            %540 = vst.msk [vmem:[#allocation2 + $0x30] sm:$0xff] %vm533, 0.0
            %541 = vst.msk [vmem:[#allocation2 + $0x38] sm:$0xff] %vm533, 0.0
            %542 = vst.msk [vmem:[#allocation3] sm:$0xff] %vm533, 0.0
            %543 = vst.msk [vmem:[#allocation3 + $0x8] sm:$0xff] %vm533, 0.0
            %544 = vst.msk [vmem:[#allocation3 + $0x10] sm:$0xff] %vm533, 0.0
            %545 = vst.msk [vmem:[#allocation3 + $0x18] sm:$0xff] %vm533, 0.0
            %546 = vst.msk [vmem:[#allocation3 + $0x20] sm:$0xff] %vm533, 0.0
            %547 = vst.msk [vmem:[#allocation3 + $0x28] sm:$0xff] %vm533, 0.0
            %548 = vst.msk [vmem:[#allocation3 + $0x30] sm:$0xff] %vm533, 0.0
            %549 = vst.msk [vmem:[#allocation3 + $0x38] sm:$0xff] %vm533, 0.0
            %550 = vst.msk [vmem:[#allocation6] sm:$0xff] %vm533, 0.0
            %551 = vst.msk [vmem:[#allocation6 + $0x8] sm:$0xff] %vm533, 0.0
            %552 = vst.msk [vmem:[#allocation6 + $0x10] sm:$0xff] %vm533, 0.0
            %553 = vst.msk [vmem:[#allocation6 + $0x18] sm:$0xff] %vm533, 0.0
            %554 = vst.msk [vmem:[#allocation7] sm:$0xff] %vm533, 0.0
            %555 = vst.msk [vmem:[#allocation7 + $0x8] sm:$0xff] %vm533, 0.0
            %556 = vst.msk [vmem:[#allocation7 + $0x10] sm:$0xff] %vm533, 0.0
            %557 = vst.msk [vmem:[#allocation7 + $0x18] sm:$0xff] %vm533, 0.0
          $region72: #{tpu_custom_call.1} parent=67 // pred_fallthru
            _
          %v558 = vsel %vm392, 1, 0
          %vm559 = vcmp.eq.s32.totalorder %v558, 1
          %v560 = vsel %vm559, %v517, 0.0
          %v561 = vsel %vm559, %v518, 0.0
          %v562 = vsel %vm559, %v519, 0.0
          %v563 = vsel %vm559, %v520, 0.0
          %v564 = vsel %vm559, %v521, 0.0
          %v565 = vsel %vm559, %v522, 0.0
          %v566 = vsel %vm559, %v523, 0.0
          %v567 = vsel %vm559, %v524, 0.0
          %v568 = vld [vmem:[#allocation2] sm:$0xff]
          %v569 = vld [vmem:[#allocation2 + $0x8] sm:$0xff]
          %v570 = vld [vmem:[#allocation2 + $0x10] sm:$0xff]
          %v571 = vld [vmem:[#allocation2 + $0x18] sm:$0xff]
          %v572 = vld [vmem:[#allocation2 + $0x20] sm:$0xff]
          %v573 = vld [vmem:[#allocation2 + $0x28] sm:$0xff]
          %v574 = vld [vmem:[#allocation2 + $0x30] sm:$0xff]
          %v575 = vld [vmem:[#allocation2 + $0x38] sm:$0xff]
          %576 = vadd.xlane.f32.xlu0 %v560
          %v577 = vpop.xlane.xlu0 %576
          %578 = vadd.xlane.f32.xlu0 %v561
          %v579 = vpop.xlane.xlu0 %578
          %580 = vadd.xlane.f32.xlu0 %v562
          %v581 = vpop.xlane.xlu0 %580
          %582 = vadd.xlane.f32.xlu0 %v563
          %v583 = vpop.xlane.xlu0 %582
          %584 = vadd.xlane.f32.xlu0 %v564
          %v585 = vpop.xlane.xlu0 %584
          %586 = vadd.xlane.f32.xlu0 %v565
          %v587 = vpop.xlane.xlu0 %586
          %588 = vadd.xlane.f32.xlu0 %v566
          %v589 = vpop.xlane.xlu0 %588
          %590 = vadd.xlane.f32.xlu0 %v567
          %v591 = vpop.xlane.xlu0 %590
          %v592 = vadd.f32 %v568, %v577
          %v593 = vadd.f32 %v569, %v579
          %v594 = vadd.f32 %v570, %v581
          %v595 = vadd.f32 %v571, %v583
          %v596 = vadd.f32 %v572, %v585
          %v597 = vadd.f32 %v573, %v587
          %v598 = vadd.f32 %v574, %v589
          %v599 = vadd.f32 %v575, %v591
          %vm600 = vcmask 7168
          %601 = vst.msk [vmem:[#allocation2] sm:$0xff] %vm600, %v592
          %602 = vst.msk [vmem:[#allocation2 + $0x8] sm:$0xff] %vm600, %v593
          %603 = vst.msk [vmem:[#allocation2 + $0x10] sm:$0xff] %vm600, %v594
          %604 = vst.msk [vmem:[#allocation2 + $0x18] sm:$0xff] %vm600, %v595
          %605 = vst.msk [vmem:[#allocation2 + $0x20] sm:$0xff] %vm600, %v596
          %606 = vst.msk [vmem:[#allocation2 + $0x28] sm:$0xff] %vm600, %v597
          %607 = vst.msk [vmem:[#allocation2 + $0x30] sm:$0xff] %vm600, %v598
          %608 = vst.msk [vmem:[#allocation2 + $0x38] sm:$0xff] %vm600, %v599
          %v609 = vld [vmem:[#allocation3] sm:$0xff]
          %v610 = vld [vmem:[#allocation3 + $0x8] sm:$0xff]
          %v611 = vld [vmem:[#allocation3 + $0x10] sm:$0xff]
          %v612 = vld [vmem:[#allocation3 + $0x18] sm:$0xff]
          %v613 = vld [vmem:[#allocation3 + $0x20] sm:$0xff]
          %v614 = vld [vmem:[#allocation3 + $0x28] sm:$0xff]
          %v615 = vld [vmem:[#allocation3 + $0x30] sm:$0xff]
          %v616 = vld [vmem:[#allocation3 + $0x38] sm:$0xff]
          %v617 = vmul.f32 %v560, %v560
          %v618 = vmul.f32 %v561, %v561
          %v619 = vmul.f32 %v562, %v562
          %v620 = vmul.f32 %v563, %v563
          %v621 = vmul.f32 %v564, %v564
          %v622 = vmul.f32 %v565, %v565
          %v623 = vmul.f32 %v566, %v566
          %v624 = vmul.f32 %v567, %v567
          %625 = vadd.xlane.f32.xlu0 %v617
          %v626 = vpop.xlane.xlu0 %625
          %627 = vadd.xlane.f32.xlu0 %v618
          %v628 = vpop.xlane.xlu0 %627
          %629 = vadd.xlane.f32.xlu0 %v619
          %v630 = vpop.xlane.xlu0 %629
          %631 = vadd.xlane.f32.xlu0 %v620
          %v632 = vpop.xlane.xlu0 %631
          %633 = vadd.xlane.f32.xlu0 %v621
          %v634 = vpop.xlane.xlu0 %633
          %635 = vadd.xlane.f32.xlu0 %v622
          %v636 = vpop.xlane.xlu0 %635
          %637 = vadd.xlane.f32.xlu0 %v623
          %v638 = vpop.xlane.xlu0 %637
          %639 = vadd.xlane.f32.xlu0 %v624
          %v640 = vpop.xlane.xlu0 %639
          %v641 = vadd.f32 %v609, %v626
          %v642 = vadd.f32 %v610, %v628
          %v643 = vadd.f32 %v611, %v630
          %v644 = vadd.f32 %v612, %v632
          %v645 = vadd.f32 %v613, %v634
          %v646 = vadd.f32 %v614, %v636
          %v647 = vadd.f32 %v615, %v638
          %v648 = vadd.f32 %v616, %v640
          %649 = vst.msk [vmem:[#allocation3] sm:$0xff] %vm600, %v641
          %650 = vst.msk [vmem:[#allocation3 + $0x8] sm:$0xff] %vm600, %v642
          %651 = vst.msk [vmem:[#allocation3 + $0x10] sm:$0xff] %vm600, %v643
          %652 = vst.msk [vmem:[#allocation3 + $0x18] sm:$0xff] %vm600, %v644
          %653 = vst.msk [vmem:[#allocation3 + $0x20] sm:$0xff] %vm600, %v645
          %654 = vst.msk [vmem:[#allocation3 + $0x28] sm:$0xff] %vm600, %v646
          %655 = vst.msk [vmem:[#allocation3 + $0x30] sm:$0xff] %vm600, %v647
          %656 = vst.msk [vmem:[#allocation3 + $0x38] sm:$0xff] %vm600, %v648
          // Predicated region
          $region73: #{tpu_custom_call.1} parent=67 // pred_check
            %p657 = pneg %p529
          $region74: #{tpu_custom_call.1} parent=67 // pred_check_branch
            %659 = sbr.rel (%p657) target = $region76
          $region75: #{tpu_custom_call.1} parent=67 // pred_region
            %v660 = vld [vmem:[#allocation2] sm:$0xff]
            %v661 = vld [vmem:[#allocation2 + $0x8] sm:$0xff]
            %v662 = vld [vmem:[#allocation2 + $0x10] sm:$0xff]
            %v663 = vld [vmem:[#allocation2 + $0x18] sm:$0xff]
            %v664 = vld [vmem:[#allocation2 + $0x20] sm:$0xff]
            %v665 = vld [vmem:[#allocation2 + $0x28] sm:$0xff]
            %v666 = vld [vmem:[#allocation2 + $0x30] sm:$0xff]
            %v667 = vld [vmem:[#allocation2 + $0x38] sm:$0xff]
            %v668 = vmul.f32 %v660, 0.125
            %v669 = vmul.f32 %v661, 0.125
            %v670 = vmul.f32 %v662, 0.125
            %v671 = vmul.f32 %v663, 0.125
            %v672 = vmul.f32 %v664, 0.125
            %v673 = vmul.f32 %v665, 0.125
            %v674 = vmul.f32 %v666, 0.125
            %v675 = vmul.f32 %v667, 0.125
            %v676 = vld [vmem:[#allocation3] sm:$0xff]
            %v677 = vld [vmem:[#allocation3 + $0x8] sm:$0xff]
            %v678 = vld [vmem:[#allocation3 + $0x10] sm:$0xff]
            %v679 = vld [vmem:[#allocation3 + $0x18] sm:$0xff]
            %v680 = vld [vmem:[#allocation3 + $0x20] sm:$0xff]
            %v681 = vld [vmem:[#allocation3 + $0x28] sm:$0xff]
            %v682 = vld [vmem:[#allocation3 + $0x30] sm:$0xff]
            %v683 = vld [vmem:[#allocation3 + $0x38] sm:$0xff]
            %v684 = vmul.f32 %v676, 0.125
            %v685 = vmul.f32 %v677, 0.125
            %v686 = vmul.f32 %v678, 0.125
            %v687 = vmul.f32 %v679, 0.125
            %v688 = vmul.f32 %v680, 0.125
            %v689 = vmul.f32 %v681, 0.125
            %v690 = vmul.f32 %v682, 0.125
            %v691 = vmul.f32 %v683, 0.125
            %v692 = vmul.f32 %v668, %v668
            %v693 = vmul.f32 %v669, %v669
            %v694 = vmul.f32 %v670, %v670
            %v695 = vmul.f32 %v671, %v671
            %v696 = vmul.f32 %v672, %v672
            %v697 = vmul.f32 %v673, %v673
            %v698 = vmul.f32 %v674, %v674
            %v699 = vmul.f32 %v675, %v675
            %v700 = vsub.f32 %v684, %v692
            %v701 = vsub.f32 %v685, %v693
            %v702 = vsub.f32 %v686, %v694
            %v703 = vsub.f32 %v687, %v695
            %v704 = vsub.f32 %v688, %v696
            %v705 = vsub.f32 %v689, %v697
            %v706 = vsub.f32 %v690, %v698
            %v707 = vsub.f32 %v691, %v699
            %v708 = vadd.f32 %v700, 1e-05
            %v709 = vadd.f32 %v701, 1e-05
            %v710 = vadd.f32 %v702, 1e-05
            %v711 = vadd.f32 %v703, 1e-05
            %v712 = vadd.f32 %v704, 1e-05
            %v713 = vadd.f32 %v705, 1e-05
            %v714 = vadd.f32 %v706, 1e-05
            %v715 = vadd.f32 %v707, 1e-05
            %v716 = vrsqrt.pop %v708
            %v717 = vmul.f32 %v716, %v708
            %v718 = vmul.f32 %v717, %v716
            %v719 = vmul.f32 0.5, %v718
            %v720 = vsub.f32 1.5, %v719
            %v721 = vmul.f32 %v716, %v720
            %vm722 = vweird.f32 %v708
            %vm723 = vweird.f32 %v716
            %vm724 = vmor %vm722, %vm723
            %v725 = vsel %vm724, %v716, %v721
            %v726 = vrsqrt.pop %v709
            %v727 = vmul.f32 %v726, %v709
            %v728 = vmul.f32 %v727, %v726
            %v729 = vmul.f32 0.5, %v728
            %v730 = vsub.f32 1.5, %v729
            %v731 = vmul.f32 %v726, %v730
            %vm732 = vweird.f32 %v709
            %vm733 = vweird.f32 %v726
            %vm734 = vmor %vm732, %vm733
            %v735 = vsel %vm734, %v726, %v731
            %v736 = vrsqrt.pop %v710
            %v737 = vmul.f32 %v736, %v710
            %v738 = vmul.f32 %v737, %v736
            %v739 = vmul.f32 0.5, %v738
            %v740 = vsub.f32 1.5, %v739
            %v741 = vmul.f32 %v736, %v740
            %vm742 = vweird.f32 %v710
            %vm743 = vweird.f32 %v736
            %vm744 = vmor %vm742, %vm743
            %v745 = vsel %vm744, %v736, %v741
            %v746 = vrsqrt.pop %v711
            %v747 = vmul.f32 %v746, %v711
            %v748 = vmul.f32 %v747, %v746
            %v749 = vmul.f32 0.5, %v748
            %v750 = vsub.f32 1.5, %v749
            %v751 = vmul.f32 %v746, %v750
            %vm752 = vweird.f32 %v711
            %vm753 = vweird.f32 %v746
            %vm754 = vmor %vm752, %vm753
            %v755 = vsel %vm754, %v746, %v751
            %v756 = vrsqrt.pop %v712
            %v757 = vmul.f32 %v756, %v712
            %v758 = vmul.f32 %v757, %v756
            %v759 = vmul.f32 0.5, %v758
            %v760 = vsub.f32 1.5, %v759
            %v761 = vmul.f32 %v756, %v760
            %vm762 = vweird.f32 %v712
            %vm763 = vweird.f32 %v756
            %vm764 = vmor %vm762, %vm763
            %v765 = vsel %vm764, %v756, %v761
            %v766 = vrsqrt.pop %v713
            %v767 = vmul.f32 %v766, %v713
            %v768 = vmul.f32 %v767, %v766
            %v769 = vmul.f32 0.5, %v768
            %v770 = vsub.f32 1.5, %v769
            %v771 = vmul.f32 %v766, %v770
            %vm772 = vweird.f32 %v713
            %vm773 = vweird.f32 %v766
            %vm774 = vmor %vm772, %vm773
            %v775 = vsel %vm774, %v766, %v771
            %v776 = vrsqrt.pop %v714
            %v777 = vmul.f32 %v776, %v714
            %v778 = vmul.f32 %v777, %v776
            %v779 = vmul.f32 0.5, %v778
            %v780 = vsub.f32 1.5, %v779
            %v781 = vmul.f32 %v776, %v780
            %vm782 = vweird.f32 %v714
            %vm783 = vweird.f32 %v776
            %vm784 = vmor %vm782, %vm783
            %v785 = vsel %vm784, %v776, %v781
            %v786 = vrsqrt.pop %v715
            %v787 = vmul.f32 %v786, %v715
            %v788 = vmul.f32 %v787, %v786
            %v789 = vmul.f32 0.5, %v788
            %v790 = vsub.f32 1.5, %v789
            %v791 = vmul.f32 %v786, %v790
            %vm792 = vweird.f32 %v715
            %vm793 = vweird.f32 %v786
            %vm794 = vmor %vm792, %vm793
            %v795 = vsel %vm794, %v786, %v791
            %v796 = vld [vmem:[%s3] sm:$0xff]
            %v797 = vld [vmem:[%s3 + $0x8] sm:$0xff]
            %v798 = vld [vmem:[%s3 + $0x10] sm:$0xff]
            %v799 = vld [vmem:[%s3 + $0x18] sm:$0xff]
            %v800 = vld [vmem:[%s3 + $0x20] sm:$0xff]
            %v801 = vld [vmem:[%s3 + $0x28] sm:$0xff]
            %v802 = vld [vmem:[%s3 + $0x30] sm:$0xff]
            %v803 = vld [vmem:[%s3 + $0x38] sm:$0xff]
            %v804 = vmul.f32 %v725, %v796
            %v805 = vmul.f32 %v735, %v797
            %v806 = vmul.f32 %v745, %v798
            %v807 = vmul.f32 %v755, %v799
            %v808 = vmul.f32 %v765, %v800
            %v809 = vmul.f32 %v775, %v801
            %v810 = vmul.f32 %v785, %v802
            %v811 = vmul.f32 %v795, %v803
            %812 = vst.msk [vmem:[#allocation4] sm:$0xff] %vm600, %v804
            %813 = vst.msk [vmem:[#allocation4 + $0x8] sm:$0xff] %vm600, %v805
            %814 = vst.msk [vmem:[#allocation4 + $0x10] sm:$0xff] %vm600, %v806
            %815 = vst.msk [vmem:[#allocation4 + $0x18] sm:$0xff] %vm600, %v807
            %816 = vst.msk [vmem:[#allocation4 + $0x20] sm:$0xff] %vm600, %v808
            %817 = vst.msk [vmem:[#allocation4 + $0x28] sm:$0xff] %vm600, %v809
            %818 = vst.msk [vmem:[#allocation4 + $0x30] sm:$0xff] %vm600, %v810
            %819 = vst.msk [vmem:[#allocation4 + $0x38] sm:$0xff] %vm600, %v811
            %v820 = vld [vmem:[%s4] sm:$0xff]
            %v821 = vld [vmem:[%s4 + $0x8] sm:$0xff]
            %v822 = vld [vmem:[%s4 + $0x10] sm:$0xff]
            %v823 = vld [vmem:[%s4 + $0x18] sm:$0xff]
            %v824 = vld [vmem:[%s4 + $0x20] sm:$0xff]
            %v825 = vld [vmem:[%s4 + $0x28] sm:$0xff]
            %v826 = vld [vmem:[%s4 + $0x30] sm:$0xff]
            %v827 = vld [vmem:[%s4 + $0x38] sm:$0xff]
            %v828 = vmul.f32 %v668, %v804
            %v829 = vmul.f32 %v669, %v805
            %v830 = vmul.f32 %v670, %v806
            %v831 = vmul.f32 %v671, %v807
            %v832 = vmul.f32 %v672, %v808
            %v833 = vmul.f32 %v673, %v809
            %v834 = vmul.f32 %v674, %v810
            %v835 = vmul.f32 %v675, %v811
            %v836 = vsub.f32 %v820, %v828
            %v837 = vsub.f32 %v821, %v829
            %v838 = vsub.f32 %v822, %v830
            %v839 = vsub.f32 %v823, %v831
            %v840 = vsub.f32 %v824, %v832
            %v841 = vsub.f32 %v825, %v833
            %v842 = vsub.f32 %v826, %v834
            %v843 = vsub.f32 %v827, %v835
            %844 = vst.msk [vmem:[#allocation5] sm:$0xff] %vm600, %v836
            %845 = vst.msk [vmem:[#allocation5 + $0x8] sm:$0xff] %vm600, %v837
            %846 = vst.msk [vmem:[#allocation5 + $0x10] sm:$0xff] %vm600, %v838
            %847 = vst.msk [vmem:[#allocation5 + $0x18] sm:$0xff] %vm600, %v839
            %848 = vst.msk [vmem:[#allocation5 + $0x20] sm:$0xff] %vm600, %v840
            %849 = vst.msk [vmem:[#allocation5 + $0x28] sm:$0xff] %vm600, %v841
            %850 = vst.msk [vmem:[#allocation5 + $0x30] sm:$0xff] %vm600, %v842
            %851 = vst.msk [vmem:[#allocation5 + $0x38] sm:$0xff] %vm600, %v843
          $region76: #{tpu_custom_call.1} parent=67 // pred_fallthru
            _
        $region68: #{tpu_custom_call.1} parent=63 // pred_fallthru
          _
        %p852 = scmp.ge.s32.totalorder %s27, 1
        // Predicated region
        $region77: #{tpu_custom_call.1} parent=63 // pred_check
          %p853 = pneg %p852
        $region78: #{tpu_custom_call.1} parent=63 // pred_check_branch
          %855 = sbr.rel (%p853) target = $region80
        $region79: #{tpu_custom_call.1} parent=63 // pred_region
          %v856 = vld [vmem:[#allocation4] sm:$0xff]
          %v857 = vld [vmem:[#allocation4 + $0x8] sm:$0xff]
          %v858 = vld [vmem:[#allocation4 + $0x10] sm:$0xff]
          %v859 = vld [vmem:[#allocation4 + $0x18] sm:$0xff]
          %v860 = vld [vmem:[#allocation4 + $0x20] sm:$0xff]
          %v861 = vld [vmem:[#allocation4 + $0x28] sm:$0xff]
          %v862 = vld [vmem:[#allocation4 + $0x30] sm:$0xff]
          %v863 = vld [vmem:[#allocation4 + $0x38] sm:$0xff]
          %865 = vset.pattern.permute.xlu0 0
          %866 = vperm.xlu0 %865, %v856
          %v867 = vpop.permute.xlu0 %866
          %870 = vset.pattern.permute.xlu0 0
          %871 = vperm.xlu0 %870, %v857
          %v872 = vpop.permute.xlu0 %871
          %875 = vset.pattern.permute.xlu0 0
          %876 = vperm.xlu0 %875, %v858
          %v877 = vpop.permute.xlu0 %876
          %880 = vset.pattern.permute.xlu0 0
          %881 = vperm.xlu0 %880, %v859
          %v882 = vpop.permute.xlu0 %881
          %885 = vset.pattern.permute.xlu0 0
          %886 = vperm.xlu0 %885, %v860
          %v887 = vpop.permute.xlu0 %886
          %890 = vset.pattern.permute.xlu0 0
          %891 = vperm.xlu0 %890, %v861
          %v892 = vpop.permute.xlu0 %891
          %895 = vset.pattern.permute.xlu0 0
          %896 = vperm.xlu0 %895, %v862
          %v897 = vpop.permute.xlu0 %896
          %900 = vset.pattern.permute.xlu0 0
          %901 = vperm.xlu0 %900, %v863
          %v902 = vpop.permute.xlu0 %901
          %v904 = vmul.f32 %v517, %v867
          %v905 = vmul.f32 %v518, %v872
          %v906 = vmul.f32 %v519, %v877
          %v907 = vmul.f32 %v520, %v882
          %v908 = vmul.f32 %v521, %v887
          %v909 = vmul.f32 %v522, %v892
          %v910 = vmul.f32 %v523, %v897
          %v911 = vmul.f32 %v524, %v902
          %v912 = vld [vmem:[#allocation5] sm:$0xff]
          %v913 = vld [vmem:[#allocation5 + $0x8] sm:$0xff]
          %v914 = vld [vmem:[#allocation5 + $0x10] sm:$0xff]
          %v915 = vld [vmem:[#allocation5 + $0x18] sm:$0xff]
          %v916 = vld [vmem:[#allocation5 + $0x20] sm:$0xff]
          %v917 = vld [vmem:[#allocation5 + $0x28] sm:$0xff]
          %v918 = vld [vmem:[#allocation5 + $0x30] sm:$0xff]
          %v919 = vld [vmem:[#allocation5 + $0x38] sm:$0xff]
          %921 = vset.pattern.permute.xlu0 0
          %922 = vperm.xlu0 %921, %v912
          %v923 = vpop.permute.xlu0 %922
          %926 = vset.pattern.permute.xlu0 0
          %927 = vperm.xlu0 %926, %v913
          %v928 = vpop.permute.xlu0 %927
          %931 = vset.pattern.permute.xlu0 0
          %932 = vperm.xlu0 %931, %v914
          %v933 = vpop.permute.xlu0 %932
          %936 = vset.pattern.permute.xlu0 0
          %937 = vperm.xlu0 %936, %v915
          %v938 = vpop.permute.xlu0 %937
          %941 = vset.pattern.permute.xlu0 0
          %942 = vperm.xlu0 %941, %v916
          %v943 = vpop.permute.xlu0 %942
          %946 = vset.pattern.permute.xlu0 0
          %947 = vperm.xlu0 %946, %v917
          %v948 = vpop.permute.xlu0 %947
          %951 = vset.pattern.permute.xlu0 0
          %952 = vperm.xlu0 %951, %v918
          %v953 = vpop.permute.xlu0 %952
          %956 = vset.pattern.permute.xlu0 0
          %957 = vperm.xlu0 %956, %v919
          %v958 = vpop.permute.xlu0 %957
          %v960 = vadd.f32 %v904, %v923
          %v961 = vadd.f32 %v905, %v928
          %v962 = vadd.f32 %v906, %v933
          %v963 = vadd.f32 %v907, %v938
          %v964 = vadd.f32 %v908, %v943
          %v965 = vadd.f32 %v909, %v948
          %v966 = vadd.f32 %v910, %v953
          %v967 = vadd.f32 %v911, %v958
          %v968 = vld [vmem:[%s5] sm:$0xff]
          %v969 = vld [vmem:[%s5 + $0x8] sm:$0xff]
          %v970 = vld [vmem:[%s5 + $0x10] sm:$0xff]
          %v971 = vld [vmem:[%s5 + $0x18] sm:$0xff]
          %v972 = vld [vmem:[%s6] sm:$0xff]
          %v973 = vld [vmem:[%s6 + $0x8] sm:$0xff]
          %v974 = vld [vmem:[%s6 + $0x10] sm:$0xff]
          %v975 = vld [vmem:[%s6 + $0x18] sm:$0xff]
          %977 = vset.pattern.permute.xlu0 0
          %978 = vperm.xlu0 %977, %v972
          %v979 = vpop.permute.xlu0 %978
          %982 = vset.pattern.permute.xlu0 0
          %983 = vperm.xlu0 %982, %v973
          %v984 = vpop.permute.xlu0 %983
          %987 = vset.pattern.permute.xlu0 0
          %988 = vperm.xlu0 %987, %v974
          %v989 = vpop.permute.xlu0 %988
          %992 = vset.pattern.permute.xlu0 0
          %993 = vperm.xlu0 %992, %v975
          %v994 = vpop.permute.xlu0 %993
          %vm996 = vcmask 523264
          %v998 = vsel %vm996, %v968, 0
          %v1001 = vsel %vm996, %v969, 0
          %v1004 = vsel %vm996, %v970, 0
          %v1007 = vsel %vm996, %v971, 0
          %1009 = vmatpush.msra.mxu0 0.0
          %1010 = vmatpush.msra.mxu0 0.0
          %1011 = vmatpush.msra.mxu0 0.0
          %1012 = vmatpush.msra.mxu0 0.0
          %1013 = vmatpush.msra.mxu0 0.0
          %1014 = vmatpush.msra.mxu0 0.0
          %1015 = vmatpush.msra.mxu0 0.0
          %1016 = vmatpush.msra.mxu0 0.0
          %1017 = vmatpush.msra.mxu0 %v967
          %1018 = vmatpush.msra.mxu0 %v966
          %1019 = vmatpush.msra.mxu0 %v965
          %1020 = vmatpush.msra.mxu0 %v964
          %1021 = vmatpush.msra.mxu0 %v963
          %1022 = vmatpush.msra.mxu0 %v962
          %1023 = vmatpush.msra.mxu0 %v961
          %1024 = vmatpush.msra.mxu0 %v960
          %1025 = vmatmul.f32.gmra.mxu0 %v998
          %v1026 = vpop.f32.mrf.mxu0
          %v1027 = vadd.f32 %v979, %v1026
          %1028 = vmatmul.f32.gmra.mxu0 %v1001
          %v1029 = vpop.f32.mrf.mxu0
          %v1030 = vadd.f32 %v984, %v1029
          %1031 = vmatmul.f32.gmra.mxu0 %v1004
          %v1032 = vpop.f32.mrf.mxu0
          %v1033 = vadd.f32 %v989, %v1032
          %1034 = vmatmul.f32.gmra.mxu0 %v1007
          %v1035 = vpop.f32.mrf.mxu0
          %v1036 = vadd.f32 %v994, %v1035
          %1037 = vdwg.mxu0
          %v1038 = vmax.f32 %v1027, 0.0
          %v1039 = vmax.f32 %v1030, 0.0
          %v1040 = vmax.f32 %v1033, 0.0
          %v1041 = vmax.f32 %v1036, 0.0
          %p1042 = scmp.eq.s32.totalorder %s27, 1
          // Predicated region
          $region81: #{tpu_custom_call.1} parent=79 // pred_check
            %p1043 = pneg %p1042
          $region82: #{tpu_custom_call.1} parent=79 // pred_check_branch
            %1045 = sbr.rel (%p1043) target = $region84
          $region83: #{tpu_custom_call.1} parent=79 // pred_region
            %v1046 = vsel %vm392, 1, 0
            %vm1047 = vcmp.eq.s32.totalorder %v1046, 1
            %v1048 = vsel %vm1047, %v1038, 0.0
            %v1049 = vsel %vm1047, %v1039, 0.0
            %v1050 = vsel %vm1047, %v1040, 0.0
            %v1051 = vsel %vm1047, %v1041, 0.0
            %v1052 = vld [vmem:[#allocation6] sm:$0xff]
            %v1053 = vld [vmem:[#allocation6 + $0x8] sm:$0xff]
            %v1054 = vld [vmem:[#allocation6 + $0x10] sm:$0xff]
            %v1055 = vld [vmem:[#allocation6 + $0x18] sm:$0xff]
            %1056 = vadd.xlane.f32.xlu0 %v1048
            %v1057 = vpop.xlane.xlu0 %1056
            %1058 = vadd.xlane.f32.xlu0 %v1049
            %v1059 = vpop.xlane.xlu0 %1058
            %1060 = vadd.xlane.f32.xlu0 %v1050
            %v1061 = vpop.xlane.xlu0 %1060
            %1062 = vadd.xlane.f32.xlu0 %v1051
            %v1063 = vpop.xlane.xlu0 %1062
            %v1064 = vadd.f32 %v1052, %v1057
            %v1065 = vadd.f32 %v1053, %v1059
            %v1066 = vadd.f32 %v1054, %v1061
            %v1067 = vadd.f32 %v1055, %v1063
            %vm1068 = vcmask 7168
            %1069 = vst.msk [vmem:[#allocation6] sm:$0xff] %vm1068, %v1064
            %1070 = vst.msk [vmem:[#allocation6 + $0x8] sm:$0xff] %vm1068, %v1065
            %1071 = vst.msk [vmem:[#allocation6 + $0x10] sm:$0xff] %vm1068, %v1066
            %1072 = vst.msk [vmem:[#allocation6 + $0x18] sm:$0xff] %vm1068, %v1067
            %v1073 = vld [vmem:[#allocation7] sm:$0xff]
            %v1074 = vld [vmem:[#allocation7 + $0x8] sm:$0xff]
            %v1075 = vld [vmem:[#allocation7 + $0x10] sm:$0xff]
            %v1076 = vld [vmem:[#allocation7 + $0x18] sm:$0xff]
            %v1077 = vmul.f32 %v1048, %v1048
            %v1078 = vmul.f32 %v1049, %v1049
            %v1079 = vmul.f32 %v1050, %v1050
            %v1080 = vmul.f32 %v1051, %v1051
            %1081 = vadd.xlane.f32.xlu0 %v1077
            %v1082 = vpop.xlane.xlu0 %1081
            %1083 = vadd.xlane.f32.xlu0 %v1078
            %v1084 = vpop.xlane.xlu0 %1083
            %1085 = vadd.xlane.f32.xlu0 %v1079
            %v1086 = vpop.xlane.xlu0 %1085
            %1087 = vadd.xlane.f32.xlu0 %v1080
            %v1088 = vpop.xlane.xlu0 %1087
            %v1089 = vadd.f32 %v1073, %v1082
            %v1090 = vadd.f32 %v1074, %v1084
            %v1091 = vadd.f32 %v1075, %v1086
            %v1092 = vadd.f32 %v1076, %v1088
            %1093 = vst.msk [vmem:[#allocation7] sm:$0xff] %vm1068, %v1089
            %1094 = vst.msk [vmem:[#allocation7 + $0x8] sm:$0xff] %vm1068, %v1090
            %1095 = vst.msk [vmem:[#allocation7 + $0x10] sm:$0xff] %vm1068, %v1091
            %1096 = vst.msk [vmem:[#allocation7 + $0x18] sm:$0xff] %vm1068, %v1092
            %p1097 = scmp.eq.s32.totalorder %s28, 0
            // Predicated region
            $region85: #{tpu_custom_call.1} parent=83 // pred_check
              %p1098 = pneg %p1097
            $region86: #{tpu_custom_call.1} parent=83 // pred_check_branch
              %1100 = sbr.rel (%p1098) target = $region88
            $region87: #{tpu_custom_call.1} parent=83 // pred_region
              %v1101 = vld [vmem:[#allocation6] sm:$0xff]
              %v1102 = vld [vmem:[#allocation6 + $0x8] sm:$0xff]
              %v1103 = vld [vmem:[#allocation6 + $0x10] sm:$0xff]
              %v1104 = vld [vmem:[#allocation6 + $0x18] sm:$0xff]
              %v1105 = vmul.f32 %v1101, 0.125
              %v1106 = vmul.f32 %v1102, 0.125
              %v1107 = vmul.f32 %v1103, 0.125
              %v1108 = vmul.f32 %v1104, 0.125
              %v1109 = vld [vmem:[#allocation7] sm:$0xff]
              %v1110 = vld [vmem:[#allocation7 + $0x8] sm:$0xff]
              %v1111 = vld [vmem:[#allocation7 + $0x10] sm:$0xff]
              %v1112 = vld [vmem:[#allocation7 + $0x18] sm:$0xff]
              %v1113 = vmul.f32 %v1109, 0.125
              %v1114 = vmul.f32 %v1110, 0.125
              %v1115 = vmul.f32 %v1111, 0.125
              %v1116 = vmul.f32 %v1112, 0.125
              %v1117 = vmul.f32 %v1105, %v1105
              %v1118 = vmul.f32 %v1106, %v1106
              %v1119 = vmul.f32 %v1107, %v1107
              %v1120 = vmul.f32 %v1108, %v1108
              %v1121 = vsub.f32 %v1113, %v1117
              %v1122 = vsub.f32 %v1114, %v1118
              %v1123 = vsub.f32 %v1115, %v1119
              %v1124 = vsub.f32 %v1116, %v1120
              %v1125 = vadd.f32 %v1121, 1e-05
              %v1126 = vadd.f32 %v1122, 1e-05
              %v1127 = vadd.f32 %v1123, 1e-05
              %v1128 = vadd.f32 %v1124, 1e-05
              %v1129 = vrsqrt.pop %v1125
              %v1130 = vmul.f32 %v1129, %v1125
              %v1131 = vmul.f32 %v1130, %v1129
              %v1132 = vmul.f32 0.5, %v1131
              %v1133 = vsub.f32 1.5, %v1132
              %v1134 = vmul.f32 %v1129, %v1133
              %vm1135 = vweird.f32 %v1125
              %vm1136 = vweird.f32 %v1129
              %vm1137 = vmor %vm1135, %vm1136
              %v1138 = vsel %vm1137, %v1129, %v1134
              %v1139 = vrsqrt.pop %v1126
              %v1140 = vmul.f32 %v1139, %v1126
              %v1141 = vmul.f32 %v1140, %v1139
              %v1142 = vmul.f32 0.5, %v1141
              %v1143 = vsub.f32 1.5, %v1142
              %v1144 = vmul.f32 %v1139, %v1143
              %vm1145 = vweird.f32 %v1126
              %vm1146 = vweird.f32 %v1139
              %vm1147 = vmor %vm1145, %vm1146
              %v1148 = vsel %vm1147, %v1139, %v1144
              %v1149 = vrsqrt.pop %v1127
              %v1150 = vmul.f32 %v1149, %v1127
              %v1151 = vmul.f32 %v1150, %v1149
              %v1152 = vmul.f32 0.5, %v1151
              %v1153 = vsub.f32 1.5, %v1152
              %v1154 = vmul.f32 %v1149, %v1153
              %vm1155 = vweird.f32 %v1127
              %vm1156 = vweird.f32 %v1149
              %vm1157 = vmor %vm1155, %vm1156
              %v1158 = vsel %vm1157, %v1149, %v1154
              %v1159 = vrsqrt.pop %v1128
              %v1160 = vmul.f32 %v1159, %v1128
              %v1161 = vmul.f32 %v1160, %v1159
              %v1162 = vmul.f32 0.5, %v1161
              %v1163 = vsub.f32 1.5, %v1162
              %v1164 = vmul.f32 %v1159, %v1163
              %vm1165 = vweird.f32 %v1128
              %vm1166 = vweird.f32 %v1159
              %vm1167 = vmor %vm1165, %vm1166
              %v1168 = vsel %vm1167, %v1159, %v1164
              %v1169 = vld [vmem:[%s7] sm:$0xff]
              %v1170 = vld [vmem:[%s7 + $0x8] sm:$0xff]
              %v1171 = vld [vmem:[%s7 + $0x10] sm:$0xff]
              %v1172 = vld [vmem:[%s7 + $0x18] sm:$0xff]
              %v1173 = vmul.f32 %v1138, %v1169
              %v1174 = vmul.f32 %v1148, %v1170
              %v1175 = vmul.f32 %v1158, %v1171
              %v1176 = vmul.f32 %v1168, %v1172
              %1177 = vst.msk [vmem:[#allocation8] sm:$0xff] %vm1068, %v1173
              %1178 = vst.msk [vmem:[#allocation8 + $0x8] sm:$0xff] %vm1068, %v1174
              %1179 = vst.msk [vmem:[#allocation8 + $0x10] sm:$0xff] %vm1068, %v1175
              %1180 = vst.msk [vmem:[#allocation8 + $0x18] sm:$0xff] %vm1068, %v1176
              %v1181 = vld [vmem:[%s8] sm:$0xff]
              %v1182 = vld [vmem:[%s8 + $0x8] sm:$0xff]
              %v1183 = vld [vmem:[%s8 + $0x10] sm:$0xff]
              %v1184 = vld [vmem:[%s8 + $0x18] sm:$0xff]
              %v1185 = vmul.f32 %v1105, %v1173
              %v1186 = vmul.f32 %v1106, %v1174
              %v1187 = vmul.f32 %v1107, %v1175
              %v1188 = vmul.f32 %v1108, %v1176
              %v1189 = vsub.f32 %v1181, %v1185
              %v1190 = vsub.f32 %v1182, %v1186
              %v1191 = vsub.f32 %v1183, %v1187
              %v1192 = vsub.f32 %v1184, %v1188
              %1193 = vst.msk [vmem:[#allocation9] sm:$0xff] %vm1068, %v1189
              %1194 = vst.msk [vmem:[#allocation9 + $0x8] sm:$0xff] %vm1068, %v1190
              %1195 = vst.msk [vmem:[#allocation9 + $0x10] sm:$0xff] %vm1068, %v1191
              %1196 = vst.msk [vmem:[#allocation9 + $0x18] sm:$0xff] %vm1068, %v1192
            $region88: #{tpu_custom_call.1} parent=83 // pred_fallthru
              _
          $region84: #{tpu_custom_call.1} parent=79 // pred_fallthru
            _
          %p1197 = scmp.eq.s32.totalorder %s27, 2
          // Predicated region
          $region89: #{tpu_custom_call.1} parent=79 // pred_check
            %p1198 = pneg %p1197
          $region90: #{tpu_custom_call.1} parent=79 // pred_check_branch
            %1200 = sbr.rel (%p1198) target = $region92
          $region91: #{tpu_custom_call.1} parent=79 // pred_region
            %v1201 = vld [vmem:[#allocation8] sm:$0xff]
            %v1202 = vld [vmem:[#allocation8 + $0x8] sm:$0xff]
            %v1203 = vld [vmem:[#allocation8 + $0x10] sm:$0xff]
            %v1204 = vld [vmem:[#allocation8 + $0x18] sm:$0xff]
            %1206 = vset.pattern.permute.xlu0 0
            %1207 = vperm.xlu0 %1206, %v1201
            %v1208 = vpop.permute.xlu0 %1207
            %1211 = vset.pattern.permute.xlu0 0
            %1212 = vperm.xlu0 %1211, %v1202
            %v1213 = vpop.permute.xlu0 %1212
            %1216 = vset.pattern.permute.xlu0 0
            %1217 = vperm.xlu0 %1216, %v1203
            %v1218 = vpop.permute.xlu0 %1217
            %1221 = vset.pattern.permute.xlu0 0
            %1222 = vperm.xlu0 %1221, %v1204
            %v1223 = vpop.permute.xlu0 %1222
            %v1225 = vmul.f32 %v1038, %v1208
            %v1226 = vmul.f32 %v1039, %v1213
            %v1227 = vmul.f32 %v1040, %v1218
            %v1228 = vmul.f32 %v1041, %v1223
            %v1229 = vld [vmem:[#allocation9] sm:$0xff]
            %v1230 = vld [vmem:[#allocation9 + $0x8] sm:$0xff]
            %v1231 = vld [vmem:[#allocation9 + $0x10] sm:$0xff]
            %v1232 = vld [vmem:[#allocation9 + $0x18] sm:$0xff]
            %1234 = vset.pattern.permute.xlu0 0
            %1235 = vperm.xlu0 %1234, %v1229
            %v1236 = vpop.permute.xlu0 %1235
            %1239 = vset.pattern.permute.xlu0 0
            %1240 = vperm.xlu0 %1239, %v1230
            %v1241 = vpop.permute.xlu0 %1240
            %1244 = vset.pattern.permute.xlu0 0
            %1245 = vperm.xlu0 %1244, %v1231
            %v1246 = vpop.permute.xlu0 %1245
            %1249 = vset.pattern.permute.xlu0 0
            %1250 = vperm.xlu0 %1249, %v1232
            %v1251 = vpop.permute.xlu0 %1250
            %v1253 = vadd.f32 %v1225, %v1236
            %v1254 = vadd.f32 %v1226, %v1241
            %v1255 = vadd.f32 %v1227, %v1246
            %v1256 = vadd.f32 %v1228, %v1251
            %v1257 = vld [vmem:[%s9] sm:$0xf]
            %v1258 = vld [vmem:[%s10] sm:$0xf]
            %1260 = vset.pattern.permute.xlu0 0
            %1261 = vperm.xlu0 %1260, %v1258
            %v1262 = vpop.permute.xlu0 %1261
            %vm1264 = vcmask 261120
            %v1266 = vsel %vm1264, %v1257, 0
            %1268 = vmatpush.msra.mxu0 0.0
            %1269 = vmatpush.msra.mxu0 0.0
            %1270 = vmatpush.msra.mxu0 0.0
            %1271 = vmatpush.msra.mxu0 0.0
            %1272 = vmatpush.msra.mxu0 0.0
            %1273 = vmatpush.msra.mxu0 0.0
            %1274 = vmatpush.msra.mxu0 0.0
            %1275 = vmatpush.msra.mxu0 0.0
            %1276 = vmatpush.msra.mxu0 0.0
            %1277 = vmatpush.msra.mxu0 0.0
            %1278 = vmatpush.msra.mxu0 0.0
            %1279 = vmatpush.msra.mxu0 0.0
            %1280 = vmatpush.msra.mxu0 %v1256
            %1281 = vmatpush.msra.mxu0 %v1255
            %1282 = vmatpush.msra.mxu0 %v1254
            %1283 = vmatpush.msra.mxu0 %v1253
            %1284 = vmatmul.f32.gmra.mxu0 %v1266
            %v1285 = vpop.f32.mrf.mxu0
            %v1286 = vadd.f32 %v1262, %v1285
            %1287 = vdwg.mxu0
            %v1288 = vxor.u32 %v1286, 2147483648
            %v1289 = vmul.f32 %v1288, 1.442695
            %v1290 = vpow.pop %v1289
            %v1291 = vadd.f32 %v1290, 1.0
            %v1292 = vrcp.pop %v1291
            %v1293 = vmul.f32 %v1291, %v1292
            %v1294 = vsub.f32 1.0, %v1293
            %v1295 = vmul.f32 %v1292, %v1294
            %v1296 = vadd.f32 %v1292, %v1295
            %vm1297 = vweird.f32 %v1291
            %vm1298 = vweird.f32 %v1292
            %vm1299 = vmor %vm1297, %vm1298
            %v1300 = vsel %vm1299, %v1292, %v1296
            %v1301 = vand.u32 2147483647, %v1291
            %vm1302 = vcmp.eq.f32.partialorder %v1301, 8.507059e+37
            %v1303 = vand.u32 %v1291, 2147483648
            %v1304 = vor.u32 1.1754944e-38, %v1303
            %v1305 = vsel %vm1302, %v1304, %v1300
            %v1306 = vmul.f32 1.0, %v1305
            %1307 = vst [vmem:[#allocation10] sm:$0xf] %v1306
          $region92: #{tpu_custom_call.1} parent=79 // pred_fallthru
            _
        $region80: #{tpu_custom_call.1} parent=63 // pred_fallthru
          _
        %p1308 = scmp.ne.s32.totalorder %s27, 2
        // Predicated region
        $region93: #{tpu_custom_call.1} parent=63 // pred_check
          %p1309 = pneg %p1308
        $region94: #{tpu_custom_call.1} parent=63 // pred_check_branch
          %1311 = sbr.rel (%p1309) target = $region96
        $region95: #{tpu_custom_call.1} parent=63 // pred_region
          %1312 = vst [vmem:[#allocation10] sm:$0xf] 0.0
        $region96: #{tpu_custom_call.1} parent=63 // pred_fallthru
          _
        // Predicated region
        $region97: #{tpu_custom_call.1} parent=63 // pred_check
          %p1313 = pneg %p289
        $region98: #{tpu_custom_call.1} parent=63 // pred_check_branch
          %1315 = sbr.rel (%p1313) target = $region100
        $region99: #{tpu_custom_call.1} parent=63 // pred_region
          %1317 = vsyncadd [#allocation11], 0
          %s1318 = smul.addr %s28, 4
          %s1319 = scalar_lea.hbm %s11, %s1318
          %s1321 = sshll.u32 [#allocation10], 4
          %s1322 = int_to_ptr.vmem [resolvable:$true] %s1321
          %s1323 = sshll.u32 %s1319, 4
          %s1324 = int_to_ptr.hbm [resolvable:$true] %s1323
          %1326 = dma.vmem_to_hbm [thread:$0]  %s1322, 64, %s1324, [#allocation11]
        $region100: #{tpu_custom_call.1} parent=63 // pred_fallthru
          _
        // Predicated region
        $region101: #{tpu_custom_call.1} parent=63 // pred_check
          %p1327 = pneg %p289
        $region102: #{tpu_custom_call.1} parent=63 // pred_check_branch
          %1329 = sbr.rel (%p1327) target = $region104
        $region103: #{tpu_custom_call.1} parent=63 // pred_region
          %1331 = dma.done [#allocation11], 64
        $region104: #{tpu_custom_call.1} parent=63 // pred_fallthru
          _
      $region64: #{tpu_custom_call.1} parent=5 // pred_fallthru
        _
      %p1332 = scmp.le.s32.totalorder 2, %s18
      // Predicated region
      $region105: #{tpu_custom_call.1} parent=5 // pred_check
        %p1333 = pneg %p1332
      $region106: #{tpu_custom_call.1} parent=5 // pred_check_branch
        %1335 = sbr.rel (%p1333) target = $region108
      $region107: #{tpu_custom_call.1} parent=5 // pred_region
        %s1336 = ssub.s32 %s18, 2
      $region108: #{tpu_custom_call.1} parent=5 // pred_fallthru
        _
    $region6: #{tpu_custom_call.1} parent=1 // loop_footer
      %s22 = sadd.s32 1, %s18
    $region7: #{tpu_custom_call.1} parent=1 // loop_footer_branch
      %17 = sbr.rel target = $region3
    $region8: #{tpu_custom_call.1} parent=1 // loop_exit
      _
    %1337 = vsyncpa [#allocation11], 1
    %s1338 = scalar_lea.sflag [#allocation11], 1
    %1339 = vsyncpa %s1338, 1

</llo_original>
